<compile_context>
chip_gen: v7x
topology: tpu7x:2x2x1
jax: 0.10.0
libtpu: 0.0.40
codegen_flags: <defaults>
</compile_context>

<pallas_src>
import jax
import jax.numpy as jnp
from jax.experimental import pallas as pl
from jax.experimental.pallas import tpu as pltpu

# (kernel_size, offset of this block's taps inside the packed (8, C, C) weights)
_BLOCKS = ((4, 0), (3, 4), (1, 7))
_EPS = 1e-5


def duration_predictor_kernel(x_ref, taps_ref, affine_ref, wf_ref, bf_ref,
                              out_ref, pad_sc):
    """Whole forward pass in one grid step; everything resident in VMEM."""
    B, T, C = x_ref.shape
    h = x_ref[...]                                       # (B, T, C) f32, in vregs

    for i, (K, off) in enumerate(_BLOCKS):
        Tv = T - (K - 1)                                 # valid conv length
        begin = (K - 1) // 2                             # ZeroTemporalPad front
        end = (K - 1) - begin                            # ZeroTemporalPad back

        aff = affine_ref[i]                              # (3, C)
        b_conv = aff[0:1, :]                             # (1, C)
        gamma = aff[1:2, :]                              # (1, C)
        beta = aff[2:3, :]                               # (1, C)

        # Valid 1-D conv over time as K time-shifted (B*T, C) @ (C, C) matmuls.
        h2 = h.reshape(B * T, C)
        acc = None
        for k in range(K):
            zk = jnp.dot(h2, taps_ref[off + k],
                         preferred_element_type=jnp.float32).reshape(B, T, C)
            part = zk[:, k:k + Tv, :]                    # (B, Tv, C)
            acc = part if acc is None else acc + part
        a = jnp.maximum(acc + b_conv, 0.0)               # conv bias + ReLU

        # ZeroTemporalPad back to T rows.  Only the 1-2 pad edge rows are
        # zeroed; the valid window is stored directly (no full-slab memset).
        # The zero rows take part in the normalization statistics, matching
        # the PyTorch module.
        if K > 1:
            if begin > 0:
                pad_sc[:, 0:begin, :] = jnp.zeros((B, begin, C), jnp.float32)
            pad_sc[:, begin:begin + Tv, :] = a
            if end > 0:
                pad_sc[:, begin + Tv:T, :] = jnp.zeros((B, end, C), jnp.float32)
            a_flat = pad_sc[...].reshape(B * T, C)
        else:
            a_flat = a.reshape(B * T, C)

        # FreqNorm == BatchNorm1d per channel over (batch, time):
        # train-mode batch statistics, biased variance, eps = 1e-5.
        mean = jnp.mean(a_flat, axis=0, keepdims=True)                    # (1, C)
        var = jnp.mean(jnp.square(a_flat - mean), axis=0, keepdims=True)  # (1, C)
        normed = (a_flat - mean) * jax.lax.rsqrt(var + _EPS) * gamma + beta

        h = h + normed.reshape(B, T, C)                  # residual connection

    # Final Conv1d(channels -> 1, kernel_size=1): (B*T, C) @ (C, 1) + bias.
    out = jnp.dot(h.reshape(B * T, C), wf_ref[...],
                  preferred_element_type=jnp.float32) + bf_ref[...]
    out_ref[...] = out.astype(out_ref.dtype)


def duration_predictor(x, params):
    """x: (B, T, channels) float32. Returns log-durations of shape (B, T, 1)."""
    B, T, C = x.shape
    assert T >= 4, "need at least 4 timesteps for the kernel_size=4 block"

    def full(shape):
        return pl.BlockSpec(shape, lambda i, n=len(shape): (0,) * n)

    grid_spec = pltpu.PrefetchScalarGridSpec(
        num_scalar_prefetch=0,
        grid=(1,),                                       # single step: no per-step overhead
        in_specs=[
            full((B, T, C)),                             # x
            full(params["w_taps"].shape),                # (8, C, C) packed conv taps
            full(params["affine"].shape),                # (3, 3, C) conv bias / gamma / beta
            full(params["w_final"].shape),               # (C, 1)
            full(params["b_final"].shape),               # (1, 1)
        ],
        out_specs=full((B * T, 1)),
        scratch_shapes=[pltpu.VMEM((B, T, C), jnp.float32)],   # ZeroTemporalPad buffer
    )

    out = pl.pallas_call(
        duration_predictor_kernel,
        out_shape=jax.ShapeDtypeStruct((B * T, 1), jnp.float32),
        grid_spec=grid_spec,
        compiler_params=pltpu.CompilerParams(dimension_semantics=("arbitrary",)),
    )(x, params["w_taps"], params["affine"], params["w_final"], params["b_final"])
    return out.reshape(B, T, 1)


def init_params(key, channels):
    """Deterministic synthetic parameters in a packed, kernel-friendly layout.

    w_taps : (8, C, C)  conv taps, pre-transposed to (C_in, C_out) per tap.
                        Taps [0:4] -> block0 (K=4), [4:7] -> block1 (K=3),
                        [7:8] -> block2 (K=1). PyTorch Conv1d weight
                        (C_out, C_in, K) maps via w_taps[off+k] = weight[:, :, k].T.
    affine : (3, 3, C)  per residual block: row0 conv bias, row1 FreqNorm gamma,
                        row2 FreqNorm beta.
    w_final: (C, 1), b_final: (1, 1)  the final Conv1d(channels, 1).
    """
    ks = jax.random.split(key, 6)
    scale = 0.5 / (channels ** 0.5)
    w_taps = scale * jax.random.normal(ks[0], (8, channels, channels), jnp.float32)
    b_conv = 0.1 * jax.random.normal(ks[1], (3, channels), jnp.float32)
    gamma = 1.0 + 0.1 * jax.random.normal(ks[2], (3, channels), jnp.float32)
    beta = 0.1 * jax.random.normal(ks[3], (3, channels), jnp.float32)
    affine = jnp.stack([b_conv, gamma, beta], axis=1)          # (3, 3, C)
    w_final = scale * jax.random.normal(ks[4], (channels, 1), jnp.float32)
    b_final = 0.1 * jax.random.normal(ks[5], (1, 1), jnp.float32)
    return dict(w_taps=w_taps, affine=affine, w_final=w_final, b_final=b_final)


def duration_predictor_reference(x, params):
    """Pure-JAX reference mirroring the PyTorch module (train-mode FreqNorm)."""
    B, T, C = x.shape
    h = x
    for i, (K, off) in enumerate(_BLOCKS):
        w = params["w_taps"][off:off + K]                # (K, C, C)
        b_conv = params["affine"][i, 0]                  # (C,)
        gamma = params["affine"][i, 1]
        beta = params["affine"][i, 2]
        Tv = T - (K - 1)
        # Valid conv over time, computed window-by-window (independent impl).
        y = jnp.stack(
            [jnp.einsum("bkc,kcd->bd", h[:, t:t + K, :], w) + b_conv
             for t in range(Tv)], axis=1)                # (B, Tv, C)
        a = jnp.maximum(y, 0.0)
        total_pad = K - 1
        begin = total_pad // 2
        end = total_pad - begin
        a = jnp.pad(a, ((0, 0), (begin, end), (0, 0)))   # ZeroTemporalPad
        mean = a.mean(axis=(0, 1), keepdims=True)
        var = a.var(axis=(0, 1), keepdims=True)          # biased, as BatchNorm uses
        normed = (a - mean) / jnp.sqrt(var + _EPS) * gamma + beta
        h = h + normed
    out = jnp.einsum("btc,cd->btd", h, params["w_final"]) + params["b_final"][0, 0]
    return out


if __name__ == "__main__":
    # Small shapes consistent with the module: hp.channels = 32, batch = 2,
    # phoneme sequence length = 16.
    B, T, C = 2, 16, 32

    key = jax.random.PRNGKey(0)
    k_params, k_x = jax.random.split(key)
    params = init_params(k_params, C)
    x = jax.random.normal(k_x, (B, T, C), jnp.float32)

    out = duration_predictor(x, params)
    out = jax.block_until_ready(out)

    ref = duration_predictor_reference(x, params)
    assert out.shape == (B, T, 1)
    assert jnp.allclose(out, ref, atol=1e-4, rtol=1e-4), (
        "mismatch vs reference, max abs err "
        f"{float(jnp.max(jnp.abs(out - ref)))}")

    print("KERNEL_OK")
</pallas_src>

<mosaic_0001>
module attributes {stable_mosaic.version = 11 : i64} {
  func.func @duration_predictor_kernel(%arg0: i32, %arg1: memref<2x16x32xf32, #tpu.memory_space<vmem>>, %arg2: memref<8x32x32xf32, #tpu.memory_space<vmem>>, %arg3: memref<3x3x32xf32, #tpu.memory_space<vmem>>, %arg4: memref<32x1xf32, #tpu.memory_space<vmem>>, %arg5: memref<1x1xf32, #tpu.memory_space<vmem>>, %arg6: memref<32x1xf32, #tpu.memory_space<vmem>>, %arg7: memref<2x16x32xf32, #tpu.memory_space<vmem>>) attributes {dimension_semantics = [#tpu.dimension_semantics<arbitrary>], iteration_bounds = array<i64: 1>, scalar_prefetch = 0 : i64, scratch_operands = 1 : i64, tpu.core_type = #tpu.core_type<tc>, window_params = [{pipeline_mode = #tpu.pipeline_mode<synchronous>, transform_indices = @transform_0, window_bounds = array<i64: 2, 16, 32>}, {pipeline_mode = #tpu.pipeline_mode<synchronous>, transform_indices = @transform_1, window_bounds = array<i64: 8, 32, 32>}, {pipeline_mode = #tpu.pipeline_mode<synchronous>, transform_indices = @transform_2, window_bounds = array<i64: 3, 3, 32>}, {pipeline_mode = #tpu.pipeline_mode<synchronous>, transform_indices = @transform_3, window_bounds = array<i64: 32, 1>}, {pipeline_mode = #tpu.pipeline_mode<synchronous>, transform_indices = @transform_4, window_bounds = array<i64: 1, 1>}, {pipeline_mode = #tpu.pipeline_mode<synchronous>, transform_indices = @transform_5, window_bounds = array<i64: 32, 1>}]} {
    %c0 = arith.constant 0 : index
    %c0_0 = arith.constant 0 : index
    %c0_1 = arith.constant 0 : index
    %0 = vector.load %arg1[%c0, %c0_0, %c0_1] : memref<2x16x32xf32, #tpu.memory_space<vmem>>, vector<2x16x32xf32>
    %c0_2 = arith.constant 0 : index
    %c0_3 = arith.constant 0 : index
    %c0_4 = arith.constant 0 : index
    %1 = vector.load %arg3[%c0_2, %c0_3, %c0_4] : memref<3x3x32xf32, #tpu.memory_space<vmem>>, vector<1x3x32xf32>
    %2 = vector.shape_cast %1 : vector<1x3x32xf32> to vector<3x32xf32>
    %3 = vector.extract_strided_slice %2 {offsets = [0, 0], sizes = [1, 32], strides = [1, 1]} : vector<3x32xf32> to vector<1x32xf32>
    %4 = vector.extract_strided_slice %2 {offsets = [1, 0], sizes = [1, 32], strides = [1, 1]} : vector<3x32xf32> to vector<1x32xf32>
    %5 = vector.extract_strided_slice %2 {offsets = [2, 0], sizes = [1, 32], strides = [1, 1]} : vector<3x32xf32> to vector<1x32xf32>
    %6 = vector.shape_cast %0 : vector<2x16x32xf32> to vector<32x32xf32>
    %c0_5 = arith.constant 0 : index
    %c0_6 = arith.constant 0 : index
    %c0_7 = arith.constant 0 : index
    %7 = vector.load %arg2[%c0_5, %c0_6, %c0_7] : memref<8x32x32xf32, #tpu.memory_space<vmem>>, vector<1x32x32xf32>
    %8 = vector.shape_cast %7 : vector<1x32x32xf32> to vector<32x32xf32>
    %cst = arith.constant dense<0.000000e+00> : vector<32x32xf32>
    %9 = tpu.matmul %6, %8, %cst {dimension_numbers = #tpu.dot_dimension_numbers<[1], [0], [0], [1], [0, 0, 1, 1], [], []>} : vector<32x32xf32>, vector<32x32xf32>, vector<32x32xf32> -> vector<32x32xf32>
    %10 = vector.shape_cast %9 : vector<32x32xf32> to vector<2x16x32xf32>
    %11 = vector.extract_strided_slice %10 {offsets = [0, 0, 0], sizes = [2, 13, 32], strides = [1, 1, 1]} : vector<2x16x32xf32> to vector<2x13x32xf32>
    %c1 = arith.constant 1 : index
    %c0_8 = arith.constant 0 : index
    %c0_9 = arith.constant 0 : index
    %12 = vector.load %arg2[%c1, %c0_8, %c0_9] : memref<8x32x32xf32, #tpu.memory_space<vmem>>, vector<1x32x32xf32>
    %13 = vector.shape_cast %12 : vector<1x32x32xf32> to vector<32x32xf32>
    %cst_10 = arith.constant dense<0.000000e+00> : vector<32x32xf32>
    %14 = tpu.matmul %6, %13, %cst_10 {dimension_numbers = #tpu.dot_dimension_numbers<[1], [0], [0], [1], [0, 0, 1, 1], [], []>} : vector<32x32xf32>, vector<32x32xf32>, vector<32x32xf32> -> vector<32x32xf32>
    %15 = vector.shape_cast %14 : vector<32x32xf32> to vector<2x16x32xf32>
    %16 = vector.extract_strided_slice %15 {offsets = [0, 1, 0], sizes = [2, 13, 32], strides = [1, 1, 1]} : vector<2x16x32xf32> to vector<2x13x32xf32>
    %17 = arith.addf %11, %16 : vector<2x13x32xf32>
    %c2 = arith.constant 2 : index
    %c0_11 = arith.constant 0 : index
    %c0_12 = arith.constant 0 : index
    %18 = vector.load %arg2[%c2, %c0_11, %c0_12] : memref<8x32x32xf32, #tpu.memory_space<vmem>>, vector<1x32x32xf32>
    %19 = vector.shape_cast %18 : vector<1x32x32xf32> to vector<32x32xf32>
    %cst_13 = arith.constant dense<0.000000e+00> : vector<32x32xf32>
    %20 = tpu.matmul %6, %19, %cst_13 {dimension_numbers = #tpu.dot_dimension_numbers<[1], [0], [0], [1], [0, 0, 1, 1], [], []>} : vector<32x32xf32>, vector<32x32xf32>, vector<32x32xf32> -> vector<32x32xf32>
    %21 = vector.shape_cast %20 : vector<32x32xf32> to vector<2x16x32xf32>
    %22 = vector.extract_strided_slice %21 {offsets = [0, 2, 0], sizes = [2, 13, 32], strides = [1, 1, 1]} : vector<2x16x32xf32> to vector<2x13x32xf32>
    %23 = arith.addf %17, %22 : vector<2x13x32xf32>
    %c3 = arith.constant 3 : index
    %c0_14 = arith.constant 0 : index
    %c0_15 = arith.constant 0 : index
    %24 = vector.load %arg2[%c3, %c0_14, %c0_15] : memref<8x32x32xf32, #tpu.memory_space<vmem>>, vector<1x32x32xf32>
    %25 = vector.shape_cast %24 : vector<1x32x32xf32> to vector<32x32xf32>
    %cst_16 = arith.constant dense<0.000000e+00> : vector<32x32xf32>
    %26 = tpu.matmul %6, %25, %cst_16 {dimension_numbers = #tpu.dot_dimension_numbers<[1], [0], [0], [1], [0, 0, 1, 1], [], []>} : vector<32x32xf32>, vector<32x32xf32>, vector<32x32xf32> -> vector<32x32xf32>
    %27 = vector.shape_cast %26 : vector<32x32xf32> to vector<2x16x32xf32>
    %28 = vector.extract_strided_slice %27 {offsets = [0, 3, 0], sizes = [2, 13, 32], strides = [1, 1, 1]} : vector<2x16x32xf32> to vector<2x13x32xf32>
    %29 = arith.addf %23, %28 : vector<2x13x32xf32>
    %30 = vector.shape_cast %3 : vector<1x32xf32> to vector<1x1x32xf32>
    %31 = vector.broadcast %30 : vector<1x1x32xf32> to vector<2x13x32xf32>
    %32 = arith.addf %29, %31 : vector<2x13x32xf32>
    %cst_17 = arith.constant 0.000000e+00 : f32
    %33 = vector.broadcast %cst_17 : f32 to vector<2x13x32xf32>
    %34 = arith.maximumf %32, %33 : vector<2x13x32xf32>
    %cst_18 = arith.constant 0.000000e+00 : f32
    %35 = vector.broadcast %cst_18 : f32 to vector<2x1x32xf32>
    %c0_19 = arith.constant 0 : index
    %c0_20 = arith.constant 0 : index
    %c0_21 = arith.constant 0 : index
    %36 = vector.load %arg7[%c0_19, %c0_20, %c0_21] : memref<2x16x32xf32, #tpu.memory_space<vmem>>, vector<2x1x32xf32>
    tpu.vector_store %arg7[%c0_19, %c0_20, %c0_21], %35 {strides = array<i32>} : memref<2x16x32xf32, #tpu.memory_space<vmem>>, vector<2x1x32xf32>,
    %c0_22 = arith.constant 0 : index
    %c1_23 = arith.constant 1 : index
    %c0_24 = arith.constant 0 : index
    %37 = vector.load %arg7[%c0_22, %c1_23, %c0_24] : memref<2x16x32xf32, #tpu.memory_space<vmem>>, vector<2x13x32xf32>
    tpu.vector_store %arg7[%c0_22, %c1_23, %c0_24], %34 {strides = array<i32>} : memref<2x16x32xf32, #tpu.memory_space<vmem>>, vector<2x13x32xf32>,
    %cst_25 = arith.constant 0.000000e+00 : f32
    %38 = vector.broadcast %cst_25 : f32 to vector<2x2x32xf32>
    %c0_26 = arith.constant 0 : index
    %c14 = arith.constant 14 : index
    %c0_27 = arith.constant 0 : index
    %39 = vector.load %arg7[%c0_26, %c14, %c0_27] : memref<2x16x32xf32, #tpu.memory_space<vmem>>, vector<2x2x32xf32>
    tpu.vector_store %arg7[%c0_26, %c14, %c0_27], %38 {strides = array<i32>} : memref<2x16x32xf32, #tpu.memory_space<vmem>>, vector<2x2x32xf32>,
    %c0_28 = arith.constant 0 : index
    %c0_29 = arith.constant 0 : index
    %c0_30 = arith.constant 0 : index
    %40 = vector.load %arg7[%c0_28, %c0_29, %c0_30] : memref<2x16x32xf32, #tpu.memory_space<vmem>>, vector<2x16x32xf32>
    %41 = vector.shape_cast %40 : vector<2x16x32xf32> to vector<32x32xf32>
    %cst_31 = arith.constant dense<0.000000e+00> : vector<32xf32>
    %42 = vector.multi_reduction <add>, %41, %cst_31 [0] : vector<32x32xf32> to vector<32xf32>
    %43 = vector.shape_cast %42 : vector<32xf32> to vector<1x32xf32>
    %cst_32 = arith.constant 3.200000e+01 : f32
    %44 = vector.broadcast %cst_32 : f32 to vector<1x32xf32>
    %45 = arith.divf %43, %44 : vector<1x32xf32>
    %46 = vector.broadcast %45 : vector<1x32xf32> to vector<32x32xf32>
    %47 = arith.subf %41, %46 : vector<32x32xf32>
    %48 = arith.mulf %47, %47 : vector<32x32xf32>
    %cst_33 = arith.constant dense<0.000000e+00> : vector<32xf32>
    %49 = vector.multi_reduction <add>, %48, %cst_33 [0] : vector<32x32xf32> to vector<32xf32>
    %50 = vector.shape_cast %49 : vector<32xf32> to vector<1x32xf32>
    %cst_34 = arith.constant 3.200000e+01 : f32
    %51 = vector.broadcast %cst_34 : f32 to vector<1x32xf32>
    %52 = arith.divf %50, %51 : vector<1x32xf32>
    %53 = vector.broadcast %45 : vector<1x32xf32> to vector<32x32xf32>
    %54 = arith.subf %41, %53 : vector<32x32xf32>
    %cst_35 = arith.constant 9.99999974E-6 : f32
    %55 = vector.broadcast %cst_35 : f32 to vector<1x32xf32>
    %56 = arith.addf %52, %55 : vector<1x32xf32>
    %57 = math.rsqrt %56 : vector<1x32xf32>
    %58 = vector.broadcast %57 : vector<1x32xf32> to vector<32x32xf32>
    %59 = arith.mulf %54, %58 : vector<32x32xf32>
    %60 = vector.broadcast %4 : vector<1x32xf32> to vector<32x32xf32>
    %61 = arith.mulf %59, %60 : vector<32x32xf32>
    %62 = vector.broadcast %5 : vector<1x32xf32> to vector<32x32xf32>
    %63 = arith.addf %61, %62 : vector<32x32xf32>
    %64 = vector.shape_cast %63 : vector<32x32xf32> to vector<2x16x32xf32>
    %65 = arith.addf %0, %64 : vector<2x16x32xf32>
    %c1_36 = arith.constant 1 : index
    %c0_37 = arith.constant 0 : index
    %c0_38 = arith.constant 0 : index
    %66 = vector.load %arg3[%c1_36, %c0_37, %c0_38] : memref<3x3x32xf32, #tpu.memory_space<vmem>>, vector<1x3x32xf32>
    %67 = vector.shape_cast %66 : vector<1x3x32xf32> to vector<3x32xf32>
    %68 = vector.extract_strided_slice %67 {offsets = [0, 0], sizes = [1, 32], strides = [1, 1]} : vector<3x32xf32> to vector<1x32xf32>
    %69 = vector.extract_strided_slice %67 {offsets = [1, 0], sizes = [1, 32], strides = [1, 1]} : vector<3x32xf32> to vector<1x32xf32>
    %70 = vector.extract_strided_slice %67 {offsets = [2, 0], sizes = [1, 32], strides = [1, 1]} : vector<3x32xf32> to vector<1x32xf32>
    %71 = vector.shape_cast %65 : vector<2x16x32xf32> to vector<32x32xf32>
    %c4 = arith.constant 4 : index
    %c0_39 = arith.constant 0 : index
    %c0_40 = arith.constant 0 : index
    %72 = vector.load %arg2[%c4, %c0_39, %c0_40] : memref<8x32x32xf32, #tpu.memory_space<vmem>>, vector<1x32x32xf32>
    %73 = vector.shape_cast %72 : vector<1x32x32xf32> to vector<32x32xf32>
    %cst_41 = arith.constant dense<0.000000e+00> : vector<32x32xf32>
    %74 = tpu.matmul %71, %73, %cst_41 {dimension_numbers = #tpu.dot_dimension_numbers<[1], [0], [0], [1], [0, 0, 1, 1], [], []>} : vector<32x32xf32>, vector<32x32xf32>, vector<32x32xf32> -> vector<32x32xf32>
    %75 = vector.shape_cast %74 : vector<32x32xf32> to vector<2x16x32xf32>
    %76 = vector.extract_strided_slice %75 {offsets = [0, 0, 0], sizes = [2, 14, 32], strides = [1, 1, 1]} : vector<2x16x32xf32> to vector<2x14x32xf32>
    %c5 = arith.constant 5 : index
    %c0_42 = arith.constant 0 : index
    %c0_43 = arith.constant 0 : index
    %77 = vector.load %arg2[%c5, %c0_42, %c0_43] : memref<8x32x32xf32, #tpu.memory_space<vmem>>, vector<1x32x32xf32>
    %78 = vector.shape_cast %77 : vector<1x32x32xf32> to vector<32x32xf32>
    %cst_44 = arith.constant dense<0.000000e+00> : vector<32x32xf32>
    %79 = tpu.matmul %71, %78, %cst_44 {dimension_numbers = #tpu.dot_dimension_numbers<[1], [0], [0], [1], [0, 0, 1, 1], [], []>} : vector<32x32xf32>, vector<32x32xf32>, vector<32x32xf32> -> vector<32x32xf32>
    %80 = vector.shape_cast %79 : vector<32x32xf32> to vector<2x16x32xf32>
    %81 = vector.extract_strided_slice %80 {offsets = [0, 1, 0], sizes = [2, 14, 32], strides = [1, 1, 1]} : vector<2x16x32xf32> to vector<2x14x32xf32>
    %82 = arith.addf %76, %81 : vector<2x14x32xf32>
    %c6 = arith.constant 6 : index
    %c0_45 = arith.constant 0 : index
    %c0_46 = arith.constant 0 : index
    %83 = vector.load %arg2[%c6, %c0_45, %c0_46] : memref<8x32x32xf32, #tpu.memory_space<vmem>>, vector<1x32x32xf32>
    %84 = vector.shape_cast %83 : vector<1x32x32xf32> to vector<32x32xf32>
    %cst_47 = arith.constant dense<0.000000e+00> : vector<32x32xf32>
    %85 = tpu.matmul %71, %84, %cst_47 {dimension_numbers = #tpu.dot_dimension_numbers<[1], [0], [0], [1], [0, 0, 1, 1], [], []>} : vector<32x32xf32>, vector<32x32xf32>, vector<32x32xf32> -> vector<32x32xf32>
    %86 = vector.shape_cast %85 : vector<32x32xf32> to vector<2x16x32xf32>
    %87 = vector.extract_strided_slice %86 {offsets = [0, 2, 0], sizes = [2, 14, 32], strides = [1, 1, 1]} : vector<2x16x32xf32> to vector<2x14x32xf32>
    %88 = arith.addf %82, %87 : vector<2x14x32xf32>
    %89 = vector.shape_cast %68 : vector<1x32xf32> to vector<1x1x32xf32>
    %90 = vector.broadcast %89 : vector<1x1x32xf32> to vector<2x14x32xf32>
    %91 = arith.addf %88, %90 : vector<2x14x32xf32>
    %cst_48 = arith.constant 0.000000e+00 : f32
    %92 = vector.broadcast %cst_48 : f32 to vector<2x14x32xf32>
    %93 = arith.maximumf %91, %92 : vector<2x14x32xf32>
    %cst_49 = arith.constant 0.000000e+00 : f32
    %94 = vector.broadcast %cst_49 : f32 to vector<2x1x32xf32>
    %c0_50 = arith.constant 0 : index
    %c0_51 = arith.constant 0 : index
    %c0_52 = arith.constant 0 : index
    %95 = vector.load %arg7[%c0_50, %c0_51, %c0_52] : memref<2x16x32xf32, #tpu.memory_space<vmem>>, vector<2x1x32xf32>
    tpu.vector_store %arg7[%c0_50, %c0_51, %c0_52], %94 {strides = array<i32>} : memref<2x16x32xf32, #tpu.memory_space<vmem>>, vector<2x1x32xf32>,
    %c0_53 = arith.constant 0 : index
    %c1_54 = arith.constant 1 : index
    %c0_55 = arith.constant 0 : index
    %96 = vector.load %arg7[%c0_53, %c1_54, %c0_55] : memref<2x16x32xf32, #tpu.memory_space<vmem>>, vector<2x14x32xf32>
    tpu.vector_store %arg7[%c0_53, %c1_54, %c0_55], %93 {strides = array<i32>} : memref<2x16x32xf32, #tpu.memory_space<vmem>>, vector<2x14x32xf32>,
    %cst_56 = arith.constant 0.000000e+00 : f32
    %97 = vector.broadcast %cst_56 : f32 to vector<2x1x32xf32>
    %c0_57 = arith.constant 0 : index
    %c15 = arith.constant 15 : index
    %c0_58 = arith.constant 0 : index
    %98 = vector.load %arg7[%c0_57, %c15, %c0_58] : memref<2x16x32xf32, #tpu.memory_space<vmem>>, vector<2x1x32xf32>
    tpu.vector_store %arg7[%c0_57, %c15, %c0_58], %97 {strides = array<i32>} : memref<2x16x32xf32, #tpu.memory_space<vmem>>, vector<2x1x32xf32>,
    %c0_59 = arith.constant 0 : index
    %c0_60 = arith.constant 0 : index
    %c0_61 = arith.constant 0 : index
    %99 = vector.load %arg7[%c0_59, %c0_60, %c0_61] : memref<2x16x32xf32, #tpu.memory_space<vmem>>, vector<2x16x32xf32>
    %100 = vector.shape_cast %99 : vector<2x16x32xf32> to vector<32x32xf32>
    %cst_62 = arith.constant dense<0.000000e+00> : vector<32xf32>
    %101 = vector.multi_reduction <add>, %100, %cst_62 [0] : vector<32x32xf32> to vector<32xf32>
    %102 = vector.shape_cast %101 : vector<32xf32> to vector<1x32xf32>
    %cst_63 = arith.constant 3.200000e+01 : f32
    %103 = vector.broadcast %cst_63 : f32 to vector<1x32xf32>
    %104 = arith.divf %102, %103 : vector<1x32xf32>
    %105 = vector.broadcast %104 : vector<1x32xf32> to vector<32x32xf32>
    %106 = arith.subf %100, %105 : vector<32x32xf32>
    %107 = arith.mulf %106, %106 : vector<32x32xf32>
    %cst_64 = arith.constant dense<0.000000e+00> : vector<32xf32>
    %108 = vector.multi_reduction <add>, %107, %cst_64 [0] : vector<32x32xf32> to vector<32xf32>
    %109 = vector.shape_cast %108 : vector<32xf32> to vector<1x32xf32>
    %cst_65 = arith.constant 3.200000e+01 : f32
    %110 = vector.broadcast %cst_65 : f32 to vector<1x32xf32>
    %111 = arith.divf %109, %110 : vector<1x32xf32>
    %112 = vector.broadcast %104 : vector<1x32xf32> to vector<32x32xf32>
    %113 = arith.subf %100, %112 : vector<32x32xf32>
    %cst_66 = arith.constant 9.99999974E-6 : f32
    %114 = vector.broadcast %cst_66 : f32 to vector<1x32xf32>
    %115 = arith.addf %111, %114 : vector<1x32xf32>
    %116 = math.rsqrt %115 : vector<1x32xf32>
    %117 = vector.broadcast %116 : vector<1x32xf32> to vector<32x32xf32>
    %118 = arith.mulf %113, %117 : vector<32x32xf32>
    %119 = vector.broadcast %69 : vector<1x32xf32> to vector<32x32xf32>
    %120 = arith.mulf %118, %119 : vector<32x32xf32>
    %121 = vector.broadcast %70 : vector<1x32xf32> to vector<32x32xf32>
    %122 = arith.addf %120, %121 : vector<32x32xf32>
    %123 = vector.shape_cast %122 : vector<32x32xf32> to vector<2x16x32xf32>
    %124 = arith.addf %65, %123 : vector<2x16x32xf32>
    %c2_67 = arith.constant 2 : index
    %c0_68 = arith.constant 0 : index
    %c0_69 = arith.constant 0 : index
    %125 = vector.load %arg3[%c2_67, %c0_68, %c0_69] : memref<3x3x32xf32, #tpu.memory_space<vmem>>, vector<1x3x32xf32>
    %126 = vector.shape_cast %125 : vector<1x3x32xf32> to vector<3x32xf32>
    %127 = vector.extract_strided_slice %126 {offsets = [0, 0], sizes = [1, 32], strides = [1, 1]} : vector<3x32xf32> to vector<1x32xf32>
    %128 = vector.extract_strided_slice %126 {offsets = [1, 0], sizes = [1, 32], strides = [1, 1]} : vector<3x32xf32> to vector<1x32xf32>
    %129 = vector.extract_strided_slice %126 {offsets = [2, 0], sizes = [1, 32], strides = [1, 1]} : vector<3x32xf32> to vector<1x32xf32>
    %130 = vector.shape_cast %124 : vector<2x16x32xf32> to vector<32x32xf32>
    %c7 = arith.constant 7 : index
    %c0_70 = arith.constant 0 : index
    %c0_71 = arith.constant 0 : index
    %131 = vector.load %arg2[%c7, %c0_70, %c0_71] : memref<8x32x32xf32, #tpu.memory_space<vmem>>, vector<1x32x32xf32>
    %132 = vector.shape_cast %131 : vector<1x32x32xf32> to vector<32x32xf32>
    %cst_72 = arith.constant dense<0.000000e+00> : vector<32x32xf32>
    %133 = tpu.matmul %130, %132, %cst_72 {dimension_numbers = #tpu.dot_dimension_numbers<[1], [0], [0], [1], [0, 0, 1, 1], [], []>} : vector<32x32xf32>, vector<32x32xf32>, vector<32x32xf32> -> vector<32x32xf32>
    %134 = vector.shape_cast %133 : vector<32x32xf32> to vector<2x16x32xf32>
    %135 = vector.shape_cast %127 : vector<1x32xf32> to vector<1x1x32xf32>
    %136 = vector.broadcast %135 : vector<1x1x32xf32> to vector<2x16x32xf32>
    %137 = arith.addf %134, %136 : vector<2x16x32xf32>
    %cst_73 = arith.constant 0.000000e+00 : f32
    %138 = vector.broadcast %cst_73 : f32 to vector<2x16x32xf32>
    %139 = arith.maximumf %137, %138 : vector<2x16x32xf32>
    %140 = vector.shape_cast %139 : vector<2x16x32xf32> to vector<32x32xf32>
    %cst_74 = arith.constant dense<0.000000e+00> : vector<32xf32>
    %141 = vector.multi_reduction <add>, %140, %cst_74 [0] : vector<32x32xf32> to vector<32xf32>
    %142 = vector.shape_cast %141 : vector<32xf32> to vector<1x32xf32>
    %cst_75 = arith.constant 3.200000e+01 : f32
    %143 = vector.broadcast %cst_75 : f32 to vector<1x32xf32>
    %144 = arith.divf %142, %143 : vector<1x32xf32>
    %145 = vector.broadcast %144 : vector<1x32xf32> to vector<32x32xf32>
    %146 = arith.subf %140, %145 : vector<32x32xf32>
    %147 = arith.mulf %146, %146 : vector<32x32xf32>
    %cst_76 = arith.constant dense<0.000000e+00> : vector<32xf32>
    %148 = vector.multi_reduction <add>, %147, %cst_76 [0] : vector<32x32xf32> to vector<32xf32>
    %149 = vector.shape_cast %148 : vector<32xf32> to vector<1x32xf32>
    %cst_77 = arith.constant 3.200000e+01 : f32
    %150 = vector.broadcast %cst_77 : f32 to vector<1x32xf32>
    %151 = arith.divf %149, %150 : vector<1x32xf32>
    %152 = vector.broadcast %144 : vector<1x32xf32> to vector<32x32xf32>
    %153 = arith.subf %140, %152 : vector<32x32xf32>
    %cst_78 = arith.constant 9.99999974E-6 : f32
    %154 = vector.broadcast %cst_78 : f32 to vector<1x32xf32>
    %155 = arith.addf %151, %154 : vector<1x32xf32>
    %156 = math.rsqrt %155 : vector<1x32xf32>
    %157 = vector.broadcast %156 : vector<1x32xf32> to vector<32x32xf32>
    %158 = arith.mulf %153, %157 : vector<32x32xf32>
    %159 = vector.broadcast %128 : vector<1x32xf32> to vector<32x32xf32>
    %160 = arith.mulf %158, %159 : vector<32x32xf32>
    %161 = vector.broadcast %129 : vector<1x32xf32> to vector<32x32xf32>
    %162 = arith.addf %160, %161 : vector<32x32xf32>
    %163 = vector.shape_cast %162 : vector<32x32xf32> to vector<2x16x32xf32>
    %164 = arith.addf %124, %163 : vector<2x16x32xf32>
    %165 = vector.shape_cast %164 : vector<2x16x32xf32> to vector<32x32xf32>
    %c0_79 = arith.constant 0 : index
    %c0_80 = arith.constant 0 : index
    %166 = vector.load %arg4[%c0_79, %c0_80] : memref<32x1xf32, #tpu.memory_space<vmem>>, vector<32x1xf32>
    %cst_81 = arith.constant dense<0.000000e+00> : vector<32x1xf32>
    %167 = tpu.matmul %165, %166, %cst_81 {dimension_numbers = #tpu.dot_dimension_numbers<[1], [0], [0], [1], [0, 0, 1, 1], [], []>} : vector<32x32xf32>, vector<32x1xf32>, vector<32x1xf32> -> vector<32x1xf32>
    %c0_82 = arith.constant 0 : index
    %c0_83 = arith.constant 0 : index
    %168 = vector.load %arg5[%c0_82, %c0_83] : memref<1x1xf32, #tpu.memory_space<vmem>>, vector<1x1xf32>
    %169 = vector.broadcast %168 : vector<1x1xf32> to vector<32x1xf32>
    %170 = arith.addf %167, %169 : vector<32x1xf32>
    %c0_84 = arith.constant 0 : index
    %c0_85 = arith.constant 0 : index
    %171 = vector.load %arg6[%c0_84, %c0_85] : memref<32x1xf32, #tpu.memory_space<vmem>>, vector<32x1xf32>
    tpu.vector_store %arg6[%c0_84, %c0_85], %170 {strides = array<i32>} : memref<32x1xf32, #tpu.memory_space<vmem>>, vector<32x1xf32>,
    return
  }
  func.func @transform_0(%arg0: i32) -> (i32, i32, i32) {
    %c0_i32 = arith.constant 0 : i32
    %c0_i32_0 = arith.constant 0 : i32
    %c0_i32_1 = arith.constant 0 : i32
    %c0_i32_2 = arith.constant 0 : i32
    return %c0_i32, %c0_i32_0, %c0_i32_1 : i32, i32, i32
  }
  func.func @transform_1(%arg0: i32) -> (i32, i32, i32) {
    %c0_i32 = arith.constant 0 : i32
    %c0_i32_0 = arith.constant 0 : i32
    %c0_i32_1 = arith.constant 0 : i32
    %c0_i32_2 = arith.constant 0 : i32
    return %c0_i32, %c0_i32_0, %c0_i32_1 : i32, i32, i32
  }
  func.func @transform_2(%arg0: i32) -> (i32, i32, i32) {
    %c0_i32 = arith.constant 0 : i32
    %c0_i32_0 = arith.constant 0 : i32
    %c0_i32_1 = arith.constant 0 : i32
    %c0_i32_2 = arith.constant 0 : i32
    return %c0_i32, %c0_i32_0, %c0_i32_1 : i32, i32, i32
  }
  func.func @transform_3(%arg0: i32) -> (i32, i32) {
    %c0_i32 = arith.constant 0 : i32
    %c0_i32_0 = arith.constant 0 : i32
    %c0_i32_1 = arith.constant 0 : i32
    return %c0_i32, %c0_i32_0 : i32, i32
  }
  func.func @transform_4(%arg0: i32) -> (i32, i32) {
    %c0_i32 = arith.constant 0 : i32
    %c0_i32_0 = arith.constant 0 : i32
    %c0_i32_1 = arith.constant 0 : i32
    return %c0_i32, %c0_i32_0 : i32, i32
  }
  func.func @transform_5(%arg0: i32) -> (i32, i32) {
    %c0_i32 = arith.constant 0 : i32
    %c0_i32_0 = arith.constant 0 : i32
    %c0_i32_1 = arith.constant 0 : i32
    return %c0_i32, %c0_i32_0 : i32, i32
  }
}

</mosaic_0001>

<llo_original>
// kernel: tpu_custom_call.1
$region0: #{tpu_custom_call.1}
  #allocation0 [shape = 'u32[]', space=smem, size = 0x4, offset = 0x4, fixed_abs, tag = 'smem constant byte address 0x4 - core index']
  #allocation1 [shape = 'u32[144,128]{1,0:T(1,128)}', space=vmem, size = 0x12000, scoped, tag = 'internal scratch']
  #allocation2 [shape = 'f32[2,16,32]{2,1,0:T(8,128)}', space=vmem, size = 0x4000, scoped, tag = 'scratch operand']
  #allocation3 [shape = 'f32[1,1]{1,0:T(1,128)S(1)}', space=vmem, size = 0x200, scoped, tag = 'scoped memory for tpu_custom_call.1']
  %s0 = inlined_call_operand.vmem [shape: f32[2,16,32], index: 0, kind: input, shape index: {}]
  %s1 = inlined_call_operand.hbm [shape: f32[8,32,32], index: 1, kind: input, shape index: {}]
  %s2 = inlined_call_operand.vmem [shape: f32[3,3,32], index: 2, kind: input, shape index: {}]
  %s3 = inlined_call_operand.vmem [shape: f32[32,1], index: 3, kind: input, shape index: {}]
  %s4 = inlined_call_operand.<no memory space> [shape: f32[1,1], index: 4, kind: input, shape index: {}]
  %s5 = inlined_call_operand.vmem [shape: f32[32,1], index: 5, kind: output, shape index: {}]
  %s6 = sld [smem:[#allocation0]]
  $region34: #{tpu_custom_call.1} parent=0
    _
  %s8 = ssub.s32 1, %s6
  %s9 = scalar_select 0, %s8, %s6
  %v10 = vstv %s4
  %11 = vst [vmem:[#allocation3] sm:$0x1] %v10
  $region1: #{tpu_custom_call.1} parent=0
    #allocation4 [shape = 'u8[131072]{0}', space=vmem, size = 0x20000, scoped, tag = 'input window, operand 1, single buffered']
    #allocation5 [shape = 's32[1]{0}', space=sflag, size = 0x4, scoped, tag = 'scoped memory for tpu_custom_call.1']
    %12 = vsyncpa [#allocation5], 0
    // Predicated region
    $region2: #{tpu_custom_call.1} parent=1 // pred_check
      _
    $region3: #{tpu_custom_call.1} parent=1 // pred_check_branch
      %14 = sbr.rel (0) target = $region5
    $region4: #{tpu_custom_call.1} parent=1 // pred_region
      _
    $region5: #{tpu_custom_call.1} parent=1 // pred_fallthru
      _
    // Predicated region
    $region6: #{tpu_custom_call.1} parent=1 // pred_check
      _
    $region7: #{tpu_custom_call.1} parent=1 // pred_check_branch
      %16 = sbr.rel (0) target = $region9
    $region8: #{tpu_custom_call.1} parent=1 // pred_region
      %s18 = ssub.s32 4096, 4096
      %19 = vsyncadd [#allocation5], %s18
      %s20 = sshll.u32 [#allocation4], 4
      %s21 = int_to_ptr.vmem [resolvable:$true] %s20
      %26 = dma.hbm_to_vmem [thread:$0]  %s1, 4096, %s21, [#allocation5], 128, 128, 8
    $region9: #{tpu_custom_call.1} parent=1 // pred_fallthru
      _
    // Predicated region
    $region10: #{tpu_custom_call.1} parent=1 // pred_check
      _
    $region11: #{tpu_custom_call.1} parent=1 // pred_check_branch
      %28 = sbr.rel (0) target = $region13
    $region12: #{tpu_custom_call.1} parent=1 // pred_region
      _
    $region13: #{tpu_custom_call.1} parent=1 // pred_fallthru
      _
    // Predicated region
    $region14: #{tpu_custom_call.1} parent=1 // pred_check
      _
    $region15: #{tpu_custom_call.1} parent=1 // pred_check_branch
      %30 = sbr.rel (0) target = $region17
    $region16: #{tpu_custom_call.1} parent=1 // pred_region
      _
    $region17: #{tpu_custom_call.1} parent=1 // pred_fallthru
      _
    // Predicated region
    $region18: #{tpu_custom_call.1} parent=1 // pred_check
      _
    $region19: #{tpu_custom_call.1} parent=1 // pred_check_branch
      %32 = sbr.rel (0) target = $region21
    $region20: #{tpu_custom_call.1} parent=1 // pred_region
      _
    $region21: #{tpu_custom_call.1} parent=1 // pred_fallthru
      _
    // Predicated region
    $region22: #{tpu_custom_call.1} parent=1 // pred_check
      _
    $region23: #{tpu_custom_call.1} parent=1 // pred_check_branch
      %34 = sbr.rel (0) target = $region25
    $region24: #{tpu_custom_call.1} parent=1 // pred_region
      %35 = dma.done [#allocation5], 4096
    $region25: #{tpu_custom_call.1} parent=1 // pred_fallthru
      _
    %v36 = vld [vmem:[%s0] sm:$0xff]
    %v37 = vld [vmem:[%s0 + $0x8] sm:$0xff]
    %v38 = vld [vmem:[%s0 + $0x10] sm:$0xff]
    %v39 = vld [vmem:[%s0 + $0x18] sm:$0xff]
    %v40 = vld [vmem:[%s2] sm:$0x7]
    %v41 = vld [vmem:[#allocation4] sm:$0xff]
    %v42 = vld [vmem:[#allocation4 + $0x8] sm:$0xff]
    %v43 = vld [vmem:[#allocation4 + $0x10] sm:$0xff]
    %v44 = vld [vmem:[#allocation4 + $0x18] sm:$0xff]
    %vm45 = vcmask 261120
    %v47 = vsel %vm45, %v36, 0
    %v50 = vsel %vm45, %v37, 0
    %v53 = vsel %vm45, %v38, 0
    %v56 = vsel %vm45, %v39, 0
    %58 = vmatprep.subr.mxu0 0.0
    %59 = vmatpush1.msra.mxu0 %v41
    %60 = vmatprep.subr.mxu0 0.0
    %61 = vmatpush1.msra.mxu0 %v42
    %62 = vmatprep.subr.mxu0 0.0
    %63 = vmatpush1.msra.mxu0 %v43
    %64 = vmatprep.subr.mxu0 0.0
    %65 = vmatpush1.msra.mxu0 %v44
    %66 = vmatprep.subr.mxu0 0.0
    %67 = vmatpush1.msra.mxu0 0.0
    %68 = vmatprep.subr.mxu0 0.0
    %69 = vmatpush1.msra.mxu0 0.0
    %70 = vmatprep.subr.mxu0 0.0
    %71 = vmatpush1.msra.mxu0 0.0
    %72 = vmatprep.subr.mxu0 0.0
    %73 = vmatpush1.msra.mxu0 0.0
    %74 = vmatprep.subr.mxu0 0.0
    %75 = vmatpush1.msra.mxu0 0.0
    %76 = vmatprep.subr.mxu0 0.0
    %77 = vmatpush1.msra.mxu0 0.0
    %78 = vmatprep.subr.mxu0 0.0
    %79 = vmatpush1.msra.mxu0 0.0
    %80 = vmatprep.subr.mxu0 0.0
    %81 = vmatpush1.msra.mxu0 0.0
    %82 = vmatprep.subr.mxu0 0.0
    %83 = vmatpush1.msra.mxu0 0.0
    %84 = vmatprep.subr.mxu0 0.0
    %85 = vmatpush1.msra.mxu0 0.0
    %86 = vmatprep.subr.mxu0 0.0
    %87 = vmatpush1.msra.mxu0 0.0
    %88 = vmatprep.subr.mxu0 0.0
    %89 = vmatpush1.msra.mxu0 0.0
    %90 = vmatprep.subr.mxu0 0.0
    %91 = vmatpush1.msra.mxu0 0.0
    %92 = vmatprep.subr.mxu0 0.0
    %93 = vmatpush1.msra.mxu0 0.0
    %94 = vmatprep.subr.mxu0 0.0
    %95 = vmatpush1.msra.mxu0 0.0
    %96 = vmatprep.subr.mxu0 0.0
    %97 = vmatpush1.msra.mxu0 0.0
    %98 = vmatprep.subr.mxu0 0.0
    %99 = vmatpush1.msra.mxu0 0.0
    %100 = vmatprep.subr.mxu0 0.0
    %101 = vmatpush1.msra.mxu0 0.0
    %102 = vmatprep.subr.mxu0 0.0
    %103 = vmatpush1.msra.mxu0 0.0
    %104 = vmatprep.subr.mxu0 0.0
    %105 = vmatpush1.msra.mxu0 0.0
    %106 = vmatprep.subr.mxu0 0.0
    %107 = vmatpush1.msra.mxu0 0.0
    %108 = vmatprep.subr.mxu0 0.0
    %109 = vmatpush1.msra.mxu0 0.0
    %110 = vmatprep.subr.mxu0 0.0
    %111 = vmatpush1.msra.mxu0 0.0
    %112 = vmatprep.subr.mxu0 0.0
    %113 = vmatpush1.msra.mxu0 0.0
    %114 = vmatprep.subr.mxu0 0.0
    %115 = vmatpush1.msra.mxu0 0.0
    %116 = vmatprep.subr.mxu0 0.0
    %117 = vmatpush1.msra.mxu0 0.0
    %118 = vmatprep.subr.mxu0 0.0
    %119 = vmatpush1.msra.mxu0 0.0
    %120 = vmatprep.subr.mxu0 0.0
    %121 = vmatpush1.msra.mxu0 0.0
    %122 = vmatprep.mubr.f32.mxu0 0.0
    %123 = vmatmul.mubr.f32.gmra.mrb[0].mxu0 %v47
    %v124 = vpop.f32.mrb[0].mxu0
    %v125 = vadd.f32 0.0, %v124
    %v126 = vpop.f32.mrb[0].mxu0
    %127 = vmatprep.mubr.f32.mxu0 0.0
    %128 = vmatmul.mubr.f32.gmra.mrb[0].mxu0 %v50
    %v129 = vpop.f32.mrb[0].mxu0
    %v130 = vadd.f32 0.0, %v129
    %v131 = vpop.f32.mrb[0].mxu0
    %132 = vmatprep.mubr.f32.mxu0 0.0
    %133 = vmatmul.mubr.f32.gmra.mrb[0].mxu0 %v53
    %v134 = vpop.f32.mrb[0].mxu0
    %v135 = vadd.f32 0.0, %v134
    %v136 = vpop.f32.mrb[0].mxu0
    %137 = vmatprep.mubr.f32.mxu0 0.0
    %138 = vmatmul.mubr.f32.gmra.mrb[0].mxu0 %v56
    %v139 = vpop.f32.mrb[0].mxu0
    %v140 = vadd.f32 0.0, %v139
    %v141 = vpop.f32.mrb[0].mxu0
    %142 = vdwg.mxu0
    %s143 = scalar_lea.vmem [#allocation4], 32
    %v144 = vld [vmem:[%s143] sm:$0xff]
    %v145 = vld [vmem:[%s143 + $0x8] sm:$0xff]
    %v146 = vld [vmem:[%s143 + $0x10] sm:$0xff]
    %v147 = vld [vmem:[%s143 + $0x18] sm:$0xff]
    %148 = vmatprep.subr.mxu0 0.0
    %149 = vmatpush1.msra.mxu0 %v144
    %150 = vmatprep.subr.mxu0 0.0
    %151 = vmatpush1.msra.mxu0 %v145
    %152 = vmatprep.subr.mxu0 0.0
    %153 = vmatpush1.msra.mxu0 %v146
    %154 = vmatprep.subr.mxu0 0.0
    %155 = vmatpush1.msra.mxu0 %v147
    %156 = vmatprep.subr.mxu0 0.0
    %157 = vmatpush1.msra.mxu0 0.0
    %158 = vmatprep.subr.mxu0 0.0
    %159 = vmatpush1.msra.mxu0 0.0
    %160 = vmatprep.subr.mxu0 0.0
    %161 = vmatpush1.msra.mxu0 0.0
    %162 = vmatprep.subr.mxu0 0.0
    %163 = vmatpush1.msra.mxu0 0.0
    %164 = vmatprep.subr.mxu0 0.0
    %165 = vmatpush1.msra.mxu0 0.0
    %166 = vmatprep.subr.mxu0 0.0
    %167 = vmatpush1.msra.mxu0 0.0
    %168 = vmatprep.subr.mxu0 0.0
    %169 = vmatpush1.msra.mxu0 0.0
    %170 = vmatprep.subr.mxu0 0.0
    %171 = vmatpush1.msra.mxu0 0.0
    %172 = vmatprep.subr.mxu0 0.0
    %173 = vmatpush1.msra.mxu0 0.0
    %174 = vmatprep.subr.mxu0 0.0
    %175 = vmatpush1.msra.mxu0 0.0
    %176 = vmatprep.subr.mxu0 0.0
    %177 = vmatpush1.msra.mxu0 0.0
    %178 = vmatprep.subr.mxu0 0.0
    %179 = vmatpush1.msra.mxu0 0.0
    %180 = vmatprep.subr.mxu0 0.0
    %181 = vmatpush1.msra.mxu0 0.0
    %182 = vmatprep.subr.mxu0 0.0
    %183 = vmatpush1.msra.mxu0 0.0
    %184 = vmatprep.subr.mxu0 0.0
    %185 = vmatpush1.msra.mxu0 0.0
    %186 = vmatprep.subr.mxu0 0.0
    %187 = vmatpush1.msra.mxu0 0.0
    %188 = vmatprep.subr.mxu0 0.0
    %189 = vmatpush1.msra.mxu0 0.0
    %190 = vmatprep.subr.mxu0 0.0
    %191 = vmatpush1.msra.mxu0 0.0
    %192 = vmatprep.subr.mxu0 0.0
    %193 = vmatpush1.msra.mxu0 0.0
    %194 = vmatprep.subr.mxu0 0.0
    %195 = vmatpush1.msra.mxu0 0.0
    %196 = vmatprep.subr.mxu0 0.0
    %197 = vmatpush1.msra.mxu0 0.0
    %198 = vmatprep.subr.mxu0 0.0
    %199 = vmatpush1.msra.mxu0 0.0
    %200 = vmatprep.subr.mxu0 0.0
    %201 = vmatpush1.msra.mxu0 0.0
    %202 = vmatprep.subr.mxu0 0.0
    %203 = vmatpush1.msra.mxu0 0.0
    %204 = vmatprep.subr.mxu0 0.0
    %205 = vmatpush1.msra.mxu0 0.0
    %206 = vmatprep.subr.mxu0 0.0
    %207 = vmatpush1.msra.mxu0 0.0
    %208 = vmatprep.subr.mxu0 0.0
    %209 = vmatpush1.msra.mxu0 0.0
    %210 = vmatprep.subr.mxu0 0.0
    %211 = vmatpush1.msra.mxu0 0.0
    %212 = vmatprep.mubr.f32.mxu0 0.0
    %213 = vmatmul.mubr.f32.gmra.mrb[0].mxu0 %v47
    %v214 = vpop.f32.mrb[0].mxu0
    %v215 = vadd.f32 0.0, %v214
    %v216 = vpop.f32.mrb[0].mxu0
    %217 = vmatprep.mubr.f32.mxu0 0.0
    %218 = vmatmul.mubr.f32.gmra.mrb[0].mxu0 %v50
    %v219 = vpop.f32.mrb[0].mxu0
    %v220 = vadd.f32 0.0, %v219
    %v221 = vpop.f32.mrb[0].mxu0
    %222 = vmatprep.mubr.f32.mxu0 0.0
    %223 = vmatmul.mubr.f32.gmra.mrb[0].mxu0 %v53
    %v224 = vpop.f32.mrb[0].mxu0
    %v225 = vadd.f32 0.0, %v224
    %v226 = vpop.f32.mrb[0].mxu0
    %227 = vmatprep.mubr.f32.mxu0 0.0
    %228 = vmatmul.mubr.f32.gmra.mrb[0].mxu0 %v56
    %v229 = vpop.f32.mrb[0].mxu0
    %v230 = vadd.f32 0.0, %v229
    %v231 = vpop.f32.mrb[0].mxu0
    %232 = vdwg.mxu0
    %vm237 = vcmask 1046528
    %v238 = vrot.slane %v215, 1
    %v239 = vrot.slane %v220, 1
    %v240 = vsel %vm237, %v238, %v239
    %v241 = vrot.slane %v225, 1
    %v242 = vrot.slane %v230, 1
    %v243 = vsel %vm237, %v241, %v242
    %v248 = vadd.f32 %v125, %v240
    %v249 = vadd.f32 %v130, %v239
    %v250 = vadd.f32 %v135, %v243
    %v251 = vadd.f32 %v140, %v242
    %s252 = scalar_lea.vmem [#allocation4], 64
    %v253 = vld [vmem:[%s252] sm:$0xff]
    %v254 = vld [vmem:[%s252 + $0x8] sm:$0xff]
    %v255 = vld [vmem:[%s252 + $0x10] sm:$0xff]
    %v256 = vld [vmem:[%s252 + $0x18] sm:$0xff]
    %257 = vmatprep.subr.mxu0 0.0
    %258 = vmatpush1.msra.mxu0 %v253
    %259 = vmatprep.subr.mxu0 0.0
    %260 = vmatpush1.msra.mxu0 %v254
    %261 = vmatprep.subr.mxu0 0.0
    %262 = vmatpush1.msra.mxu0 %v255
    %263 = vmatprep.subr.mxu0 0.0
    %264 = vmatpush1.msra.mxu0 %v256
    %265 = vmatprep.subr.mxu0 0.0
    %266 = vmatpush1.msra.mxu0 0.0
    %267 = vmatprep.subr.mxu0 0.0
    %268 = vmatpush1.msra.mxu0 0.0
    %269 = vmatprep.subr.mxu0 0.0
    %270 = vmatpush1.msra.mxu0 0.0
    %271 = vmatprep.subr.mxu0 0.0
    %272 = vmatpush1.msra.mxu0 0.0
    %273 = vmatprep.subr.mxu0 0.0
    %274 = vmatpush1.msra.mxu0 0.0
    %275 = vmatprep.subr.mxu0 0.0
    %276 = vmatpush1.msra.mxu0 0.0
    %277 = vmatprep.subr.mxu0 0.0
    %278 = vmatpush1.msra.mxu0 0.0
    %279 = vmatprep.subr.mxu0 0.0
    %280 = vmatpush1.msra.mxu0 0.0
    %281 = vmatprep.subr.mxu0 0.0
    %282 = vmatpush1.msra.mxu0 0.0
    %283 = vmatprep.subr.mxu0 0.0
    %284 = vmatpush1.msra.mxu0 0.0
    %285 = vmatprep.subr.mxu0 0.0
    %286 = vmatpush1.msra.mxu0 0.0
    %287 = vmatprep.subr.mxu0 0.0
    %288 = vmatpush1.msra.mxu0 0.0
    %289 = vmatprep.subr.mxu0 0.0
    %290 = vmatpush1.msra.mxu0 0.0
    %291 = vmatprep.subr.mxu0 0.0
    %292 = vmatpush1.msra.mxu0 0.0
    %293 = vmatprep.subr.mxu0 0.0
    %294 = vmatpush1.msra.mxu0 0.0
    %295 = vmatprep.subr.mxu0 0.0
    %296 = vmatpush1.msra.mxu0 0.0
    %297 = vmatprep.subr.mxu0 0.0
    %298 = vmatpush1.msra.mxu0 0.0
    %299 = vmatprep.subr.mxu0 0.0
    %300 = vmatpush1.msra.mxu0 0.0
    %301 = vmatprep.subr.mxu0 0.0
    %302 = vmatpush1.msra.mxu0 0.0
    %303 = vmatprep.subr.mxu0 0.0
    %304 = vmatpush1.msra.mxu0 0.0
    %305 = vmatprep.subr.mxu0 0.0
    %306 = vmatpush1.msra.mxu0 0.0
    %307 = vmatprep.subr.mxu0 0.0
    %308 = vmatpush1.msra.mxu0 0.0
    %309 = vmatprep.subr.mxu0 0.0
    %310 = vmatpush1.msra.mxu0 0.0
    %311 = vmatprep.subr.mxu0 0.0
    %312 = vmatpush1.msra.mxu0 0.0
    %313 = vmatprep.subr.mxu0 0.0
    %314 = vmatpush1.msra.mxu0 0.0
    %315 = vmatprep.subr.mxu0 0.0
    %316 = vmatpush1.msra.mxu0 0.0
    %317 = vmatprep.subr.mxu0 0.0
    %318 = vmatpush1.msra.mxu0 0.0
    %319 = vmatprep.subr.mxu0 0.0
    %320 = vmatpush1.msra.mxu0 0.0
    %321 = vmatprep.mubr.f32.mxu0 0.0
    %322 = vmatmul.mubr.f32.gmra.mrb[0].mxu0 %v47
    %v323 = vpop.f32.mrb[0].mxu0
    %v324 = vadd.f32 0.0, %v323
    %v325 = vpop.f32.mrb[0].mxu0
    %326 = vmatprep.mubr.f32.mxu0 0.0
    %327 = vmatmul.mubr.f32.gmra.mrb[0].mxu0 %v50
    %v328 = vpop.f32.mrb[0].mxu0
    %v329 = vadd.f32 0.0, %v328
    %v330 = vpop.f32.mrb[0].mxu0
    %331 = vmatprep.mubr.f32.mxu0 0.0
    %332 = vmatmul.mubr.f32.gmra.mrb[0].mxu0 %v53
    %v333 = vpop.f32.mrb[0].mxu0
    %v334 = vadd.f32 0.0, %v333
    %v335 = vpop.f32.mrb[0].mxu0
    %336 = vmatprep.mubr.f32.mxu0 0.0
    %337 = vmatmul.mubr.f32.gmra.mrb[0].mxu0 %v56
    %v338 = vpop.f32.mrb[0].mxu0
    %v339 = vadd.f32 0.0, %v338
    %v340 = vpop.f32.mrb[0].mxu0
    %341 = vdwg.mxu0
    %vm346 = vcmask 1045504
    %v347 = vrot.slane %v324, 2
    %v348 = vrot.slane %v329, 2
    %v349 = vsel %vm346, %v347, %v348
    %v350 = vrot.slane %v334, 2
    %v351 = vrot.slane %v339, 2
    %v352 = vsel %vm346, %v350, %v351
    %v357 = vadd.f32 %v248, %v349
    %v358 = vadd.f32 %v249, %v348
    %v359 = vadd.f32 %v250, %v352
    %v360 = vadd.f32 %v251, %v351
    %s361 = scalar_lea.vmem [#allocation4], 96
    %v362 = vld [vmem:[%s361] sm:$0xff]
    %v363 = vld [vmem:[%s361 + $0x8] sm:$0xff]
    %v364 = vld [vmem:[%s361 + $0x10] sm:$0xff]
    %v365 = vld [vmem:[%s361 + $0x18] sm:$0xff]
    %366 = vmatprep.subr.mxu0 0.0
    %367 = vmatpush1.msra.mxu0 %v362
    %368 = vmatprep.subr.mxu0 0.0
    %369 = vmatpush1.msra.mxu0 %v363
    %370 = vmatprep.subr.mxu0 0.0
    %371 = vmatpush1.msra.mxu0 %v364
    %372 = vmatprep.subr.mxu0 0.0
    %373 = vmatpush1.msra.mxu0 %v365
    %374 = vmatprep.subr.mxu0 0.0
    %375 = vmatpush1.msra.mxu0 0.0
    %376 = vmatprep.subr.mxu0 0.0
    %377 = vmatpush1.msra.mxu0 0.0
    %378 = vmatprep.subr.mxu0 0.0
    %379 = vmatpush1.msra.mxu0 0.0
    %380 = vmatprep.subr.mxu0 0.0
    %381 = vmatpush1.msra.mxu0 0.0
    %382 = vmatprep.subr.mxu0 0.0
    %383 = vmatpush1.msra.mxu0 0.0
    %384 = vmatprep.subr.mxu0 0.0
    %385 = vmatpush1.msra.mxu0 0.0
    %386 = vmatprep.subr.mxu0 0.0
    %387 = vmatpush1.msra.mxu0 0.0
    %388 = vmatprep.subr.mxu0 0.0
    %389 = vmatpush1.msra.mxu0 0.0
    %390 = vmatprep.subr.mxu0 0.0
    %391 = vmatpush1.msra.mxu0 0.0
    %392 = vmatprep.subr.mxu0 0.0
    %393 = vmatpush1.msra.mxu0 0.0
    %394 = vmatprep.subr.mxu0 0.0
    %395 = vmatpush1.msra.mxu0 0.0
    %396 = vmatprep.subr.mxu0 0.0
    %397 = vmatpush1.msra.mxu0 0.0
    %398 = vmatprep.subr.mxu0 0.0
    %399 = vmatpush1.msra.mxu0 0.0
    %400 = vmatprep.subr.mxu0 0.0
    %401 = vmatpush1.msra.mxu0 0.0
    %402 = vmatprep.subr.mxu0 0.0
    %403 = vmatpush1.msra.mxu0 0.0
    %404 = vmatprep.subr.mxu0 0.0
    %405 = vmatpush1.msra.mxu0 0.0
    %406 = vmatprep.subr.mxu0 0.0
    %407 = vmatpush1.msra.mxu0 0.0
    %408 = vmatprep.subr.mxu0 0.0
    %409 = vmatpush1.msra.mxu0 0.0
    %410 = vmatprep.subr.mxu0 0.0
    %411 = vmatpush1.msra.mxu0 0.0
    %412 = vmatprep.subr.mxu0 0.0
    %413 = vmatpush1.msra.mxu0 0.0
    %414 = vmatprep.subr.mxu0 0.0
    %415 = vmatpush1.msra.mxu0 0.0
    %416 = vmatprep.subr.mxu0 0.0
    %417 = vmatpush1.msra.mxu0 0.0
    %418 = vmatprep.subr.mxu0 0.0
    %419 = vmatpush1.msra.mxu0 0.0
    %420 = vmatprep.subr.mxu0 0.0
    %421 = vmatpush1.msra.mxu0 0.0
    %422 = vmatprep.subr.mxu0 0.0
    %423 = vmatpush1.msra.mxu0 0.0
    %424 = vmatprep.subr.mxu0 0.0
    %425 = vmatpush1.msra.mxu0 0.0
    %426 = vmatprep.subr.mxu0 0.0
    %427 = vmatpush1.msra.mxu0 0.0
    %428 = vmatprep.subr.mxu0 0.0
    %429 = vmatpush1.msra.mxu0 0.0
    %430 = vmatprep.mubr.f32.mxu0 0.0
    %431 = vmatmul.mubr.f32.gmra.mrb[0].mxu0 %v47
    %v432 = vpop.f32.mrb[0].mxu0
    %v433 = vadd.f32 0.0, %v432
    %v434 = vpop.f32.mrb[0].mxu0
    %435 = vmatprep.mubr.f32.mxu0 0.0
    %436 = vmatmul.mubr.f32.gmra.mrb[0].mxu0 %v50
    %v437 = vpop.f32.mrb[0].mxu0
    %v438 = vadd.f32 0.0, %v437
    %v439 = vpop.f32.mrb[0].mxu0
    %440 = vmatprep.mubr.f32.mxu0 0.0
    %441 = vmatmul.mubr.f32.gmra.mrb[0].mxu0 %v53
    %v442 = vpop.f32.mrb[0].mxu0
    %v443 = vadd.f32 0.0, %v442
    %v444 = vpop.f32.mrb[0].mxu0
    %445 = vmatprep.mubr.f32.mxu0 0.0
    %446 = vmatmul.mubr.f32.gmra.mrb[0].mxu0 %v56
    %v447 = vpop.f32.mrb[0].mxu0
    %v448 = vadd.f32 0.0, %v447
    %v449 = vpop.f32.mrb[0].mxu0
    %450 = vdwg.mxu0
    %vm455 = vcmask 1044480
    %v456 = vrot.slane %v433, 3
    %v457 = vrot.slane %v438, 3
    %v458 = vsel %vm455, %v456, %v457
    %v459 = vrot.slane %v443, 3
    %v460 = vrot.slane %v448, 3
    %v461 = vsel %vm455, %v459, %v460
    %v466 = vadd.f32 %v357, %v458
    %v467 = vadd.f32 %v358, %v457
    %v468 = vadd.f32 %v359, %v461
    %v469 = vadd.f32 %v360, %v460
    %v470 = vlaneseq
    %v471 = vshrl.u32 %v470, 7
    %v472 = vsub.s32 0, %v471
    %v473 = vrot.slane %v40, %v472
    %v474 = vadd.f32 %v466, %v473
    %v475 = vadd.f32 %v467, %v473
    %v476 = vadd.f32 %v468, %v473
    %v477 = vadd.f32 %v469, %v473
    %v478 = vmax.f32 %v474, 0.0
    %v479 = vmax.f32 %v475, 0.0
    %v480 = vmax.f32 %v476, 0.0
    %v481 = vmax.f32 %v477, 0.0
    %vm482 = vcmask 253952
    %483 = vst.msk [vmem:[#allocation2] sm:$0x1] %vm482, 0.0
    %484 = vst.msk [vmem:[#allocation2 + $0x10] sm:$0x1] %vm482, 0.0
    %485 = vst.msk [vmem:[#allocation2 + $0x1] sm:$0xff] %vm45, %v478
    %vm486 = vcmask 258048
    %487 = vst.msk [vmem:[#allocation2 + $0x9] sm:$0x1f] %vm486, %v479
    %488 = vst.msk [vmem:[#allocation2 + $0x11] sm:$0xff] %vm45, %v480
    %489 = vst.msk [vmem:[#allocation2 + $0x19] sm:$0x1f] %vm486, %v481
    %vm490 = vcmask 254976
    %491 = vst.msk [vmem:[#allocation2 + $0xe] sm:$0x3] %vm490, 0.0
    %492 = vst.msk [vmem:[#allocation2 + $0x1e] sm:$0x3] %vm490, 0.0
    %v493 = vld [vmem:[#allocation2] sm:$0xff]
    %v494 = vld [vmem:[#allocation2 + $0x8] sm:$0xff]
    %v495 = vld [vmem:[#allocation2 + $0x10] sm:$0xff]
    %v496 = vld [vmem:[#allocation2 + $0x18] sm:$0xff]
    %v497 = vsel %vm45, %v493, 0.0
    %v498 = vsel %vm45, %v494, 0.0
    %v499 = vadd.f32 %v497, %v498
    %v500 = vsel %vm45, %v495, 0.0
    %v501 = vadd.f32 %v499, %v500
    %v502 = vsel %vm45, %v496, 0.0
    %v503 = vadd.f32 %v501, %v502
    %v504 = vrot.slane %v503, 4
    %v505 = vadd.f32 %v503, %v504
    %v506 = vrot.slane %v505, 2
    %v507 = vadd.f32 %v505, %v506
    %v508 = vrot.slane %v507, 1
    %v509 = vadd.f32 %v507, %v508
    %v510 = vrcp.pop 32.0
    %v511 = vmul.f32 %v509, %v510
    %v512 = vsub.f32 %v493, %v511
    %v513 = vsub.f32 %v494, %v511
    %v514 = vsub.f32 %v495, %v511
    %v515 = vsub.f32 %v496, %v511
    %v516 = vmul.f32 %v512, %v512
    %v517 = vmul.f32 %v513, %v513
    %v518 = vmul.f32 %v514, %v514
    %v519 = vmul.f32 %v515, %v515
    %v520 = vsel %vm45, %v516, 0.0
    %v521 = vsel %vm45, %v517, 0.0
    %v522 = vadd.f32 %v520, %v521
    %v523 = vsel %vm45, %v518, 0.0
    %v524 = vadd.f32 %v522, %v523
    %v525 = vsel %vm45, %v519, 0.0
    %v526 = vadd.f32 %v524, %v525
    %v527 = vrot.slane %v526, 4
    %v528 = vadd.f32 %v526, %v527
    %v529 = vrot.slane %v528, 2
    %v530 = vadd.f32 %v528, %v529
    %v531 = vrot.slane %v530, 1
    %v532 = vadd.f32 %v530, %v531
    %v533 = vmul.f32 %v532, %v510
    %v534 = vadd.f32 %v533, 1e-05
    %v535 = vrsqrt.pop %v534
    %v536 = vmul.f32 %v512, %v535
    %v537 = vmul.f32 %v513, %v535
    %v538 = vmul.f32 %v514, %v535
    %v539 = vmul.f32 %v515, %v535
    %v540 = vlaneseq
    %v541 = vshrl.u32 %v540, 7
    %v542 = vsub.s32 1, %v541
    %v543 = vrot.slane %v40, %v542
    %v544 = vmul.f32 %v536, %v543
    %v545 = vmul.f32 %v537, %v543
    %v546 = vmul.f32 %v538, %v543
    %v547 = vmul.f32 %v539, %v543
    %v548 = vlaneseq
    %v549 = vshrl.u32 %v548, 7
    %v550 = vsub.s32 2, %v549
    %v551 = vrot.slane %v40, %v550
    %v552 = vadd.f32 %v544, %v551
    %v553 = vadd.f32 %v545, %v551
    %v554 = vadd.f32 %v546, %v551
    %v555 = vadd.f32 %v547, %v551
    %v556 = vadd.f32 %v36, %v552
    %v557 = vadd.f32 %v37, %v553
    %v558 = vadd.f32 %v38, %v554
    %v559 = vadd.f32 %v39, %v555
    %s560 = scalar_lea.vmem %s2, 4
    %v561 = vld [vmem:[%s560] sm:$0x7]
    %s562 = scalar_lea.vmem [#allocation4], 128
    %v563 = vld [vmem:[%s562] sm:$0xff]
    %v564 = vld [vmem:[%s562 + $0x8] sm:$0xff]
    %v565 = vld [vmem:[%s562 + $0x10] sm:$0xff]
    %v566 = vld [vmem:[%s562 + $0x18] sm:$0xff]
    %v568 = vsel %vm45, %v556, 0
    %v571 = vsel %vm45, %v557, 0
    %v574 = vsel %vm45, %v558, 0
    %v577 = vsel %vm45, %v559, 0
    %579 = vmatprep.subr.mxu0 0.0
    %580 = vmatpush1.msra.mxu0 %v563
    %581 = vmatprep.subr.mxu0 0.0
    %582 = vmatpush1.msra.mxu0 %v564
    %583 = vmatprep.subr.mxu0 0.0
    %584 = vmatpush1.msra.mxu0 %v565
    %585 = vmatprep.subr.mxu0 0.0
    %586 = vmatpush1.msra.mxu0 %v566
    %587 = vmatprep.subr.mxu0 0.0
    %588 = vmatpush1.msra.mxu0 0.0
    %589 = vmatprep.subr.mxu0 0.0
    %590 = vmatpush1.msra.mxu0 0.0
    %591 = vmatprep.subr.mxu0 0.0
    %592 = vmatpush1.msra.mxu0 0.0
    %593 = vmatprep.subr.mxu0 0.0
    %594 = vmatpush1.msra.mxu0 0.0
    %595 = vmatprep.subr.mxu0 0.0
    %596 = vmatpush1.msra.mxu0 0.0
    %597 = vmatprep.subr.mxu0 0.0
    %598 = vmatpush1.msra.mxu0 0.0
    %599 = vmatprep.subr.mxu0 0.0
    %600 = vmatpush1.msra.mxu0 0.0
    %601 = vmatprep.subr.mxu0 0.0
    %602 = vmatpush1.msra.mxu0 0.0
    %603 = vmatprep.subr.mxu0 0.0
    %604 = vmatpush1.msra.mxu0 0.0
    %605 = vmatprep.subr.mxu0 0.0
    %606 = vmatpush1.msra.mxu0 0.0
    %607 = vmatprep.subr.mxu0 0.0
    %608 = vmatpush1.msra.mxu0 0.0
    %609 = vmatprep.subr.mxu0 0.0
    %610 = vmatpush1.msra.mxu0 0.0
    %611 = vmatprep.subr.mxu0 0.0
    %612 = vmatpush1.msra.mxu0 0.0
    %613 = vmatprep.subr.mxu0 0.0
    %614 = vmatpush1.msra.mxu0 0.0
    %615 = vmatprep.subr.mxu0 0.0
    %616 = vmatpush1.msra.mxu0 0.0
    %617 = vmatprep.subr.mxu0 0.0
    %618 = vmatpush1.msra.mxu0 0.0
    %619 = vmatprep.subr.mxu0 0.0
    %620 = vmatpush1.msra.mxu0 0.0
    %621 = vmatprep.subr.mxu0 0.0
    %622 = vmatpush1.msra.mxu0 0.0
    %623 = vmatprep.subr.mxu0 0.0
    %624 = vmatpush1.msra.mxu0 0.0
    %625 = vmatprep.subr.mxu0 0.0
    %626 = vmatpush1.msra.mxu0 0.0
    %627 = vmatprep.subr.mxu0 0.0
    %628 = vmatpush1.msra.mxu0 0.0
    %629 = vmatprep.subr.mxu0 0.0
    %630 = vmatpush1.msra.mxu0 0.0
    %631 = vmatprep.subr.mxu0 0.0
    %632 = vmatpush1.msra.mxu0 0.0
    %633 = vmatprep.subr.mxu0 0.0
    %634 = vmatpush1.msra.mxu0 0.0
    %635 = vmatprep.subr.mxu0 0.0
    %636 = vmatpush1.msra.mxu0 0.0
    %637 = vmatprep.subr.mxu0 0.0
    %638 = vmatpush1.msra.mxu0 0.0
    %639 = vmatprep.subr.mxu0 0.0
    %640 = vmatpush1.msra.mxu0 0.0
    %641 = vmatprep.subr.mxu0 0.0
    %642 = vmatpush1.msra.mxu0 0.0
    %643 = vmatprep.mubr.f32.mxu0 0.0
    %644 = vmatmul.mubr.f32.gmra.mrb[0].mxu0 %v568
    %v645 = vpop.f32.mrb[0].mxu0
    %v646 = vadd.f32 0.0, %v645
    %v647 = vpop.f32.mrb[0].mxu0
    %648 = vmatprep.mubr.f32.mxu0 0.0
    %649 = vmatmul.mubr.f32.gmra.mrb[0].mxu0 %v571
    %v650 = vpop.f32.mrb[0].mxu0
    %v651 = vadd.f32 0.0, %v650
    %v652 = vpop.f32.mrb[0].mxu0
    %653 = vmatprep.mubr.f32.mxu0 0.0
    %654 = vmatmul.mubr.f32.gmra.mrb[0].mxu0 %v574
    %v655 = vpop.f32.mrb[0].mxu0
    %v656 = vadd.f32 0.0, %v655
    %v657 = vpop.f32.mrb[0].mxu0
    %658 = vmatprep.mubr.f32.mxu0 0.0
    %659 = vmatmul.mubr.f32.gmra.mrb[0].mxu0 %v577
    %v660 = vpop.f32.mrb[0].mxu0
    %v661 = vadd.f32 0.0, %v660
    %v662 = vpop.f32.mrb[0].mxu0
    %663 = vdwg.mxu0
    %s664 = scalar_lea.vmem [#allocation4], 160
    %v665 = vld [vmem:[%s664] sm:$0xff]
    %v666 = vld [vmem:[%s664 + $0x8] sm:$0xff]
    %v667 = vld [vmem:[%s664 + $0x10] sm:$0xff]
    %v668 = vld [vmem:[%s664 + $0x18] sm:$0xff]
    %669 = vmatprep.subr.mxu0 0.0
    %670 = vmatpush1.msra.mxu0 %v665
    %671 = vmatprep.subr.mxu0 0.0
    %672 = vmatpush1.msra.mxu0 %v666
    %673 = vmatprep.subr.mxu0 0.0
    %674 = vmatpush1.msra.mxu0 %v667
    %675 = vmatprep.subr.mxu0 0.0
    %676 = vmatpush1.msra.mxu0 %v668
    %677 = vmatprep.subr.mxu0 0.0
    %678 = vmatpush1.msra.mxu0 0.0
    %679 = vmatprep.subr.mxu0 0.0
    %680 = vmatpush1.msra.mxu0 0.0
    %681 = vmatprep.subr.mxu0 0.0
    %682 = vmatpush1.msra.mxu0 0.0
    %683 = vmatprep.subr.mxu0 0.0
    %684 = vmatpush1.msra.mxu0 0.0
    %685 = vmatprep.subr.mxu0 0.0
    %686 = vmatpush1.msra.mxu0 0.0
    %687 = vmatprep.subr.mxu0 0.0
    %688 = vmatpush1.msra.mxu0 0.0
    %689 = vmatprep.subr.mxu0 0.0
    %690 = vmatpush1.msra.mxu0 0.0
    %691 = vmatprep.subr.mxu0 0.0
    %692 = vmatpush1.msra.mxu0 0.0
    %693 = vmatprep.subr.mxu0 0.0
    %694 = vmatpush1.msra.mxu0 0.0
    %695 = vmatprep.subr.mxu0 0.0
    %696 = vmatpush1.msra.mxu0 0.0
    %697 = vmatprep.subr.mxu0 0.0
    %698 = vmatpush1.msra.mxu0 0.0
    %699 = vmatprep.subr.mxu0 0.0
    %700 = vmatpush1.msra.mxu0 0.0
    %701 = vmatprep.subr.mxu0 0.0
    %702 = vmatpush1.msra.mxu0 0.0
    %703 = vmatprep.subr.mxu0 0.0
    %704 = vmatpush1.msra.mxu0 0.0
    %705 = vmatprep.subr.mxu0 0.0
    %706 = vmatpush1.msra.mxu0 0.0
    %707 = vmatprep.subr.mxu0 0.0
    %708 = vmatpush1.msra.mxu0 0.0
    %709 = vmatprep.subr.mxu0 0.0
    %710 = vmatpush1.msra.mxu0 0.0
    %711 = vmatprep.subr.mxu0 0.0
    %712 = vmatpush1.msra.mxu0 0.0
    %713 = vmatprep.subr.mxu0 0.0
    %714 = vmatpush1.msra.mxu0 0.0
    %715 = vmatprep.subr.mxu0 0.0
    %716 = vmatpush1.msra.mxu0 0.0
    %717 = vmatprep.subr.mxu0 0.0
    %718 = vmatpush1.msra.mxu0 0.0
    %719 = vmatprep.subr.mxu0 0.0
    %720 = vmatpush1.msra.mxu0 0.0
    %721 = vmatprep.subr.mxu0 0.0
    %722 = vmatpush1.msra.mxu0 0.0
    %723 = vmatprep.subr.mxu0 0.0
    %724 = vmatpush1.msra.mxu0 0.0
    %725 = vmatprep.subr.mxu0 0.0
    %726 = vmatpush1.msra.mxu0 0.0
    %727 = vmatprep.subr.mxu0 0.0
    %728 = vmatpush1.msra.mxu0 0.0
    %729 = vmatprep.subr.mxu0 0.0
    %730 = vmatpush1.msra.mxu0 0.0
    %731 = vmatprep.subr.mxu0 0.0
    %732 = vmatpush1.msra.mxu0 0.0
    %733 = vmatprep.mubr.f32.mxu0 0.0
    %734 = vmatmul.mubr.f32.gmra.mrb[0].mxu0 %v568
    %v735 = vpop.f32.mrb[0].mxu0
    %v736 = vadd.f32 0.0, %v735
    %v737 = vpop.f32.mrb[0].mxu0
    %738 = vmatprep.mubr.f32.mxu0 0.0
    %739 = vmatmul.mubr.f32.gmra.mrb[0].mxu0 %v571
    %v740 = vpop.f32.mrb[0].mxu0
    %v741 = vadd.f32 0.0, %v740
    %v742 = vpop.f32.mrb[0].mxu0
    %743 = vmatprep.mubr.f32.mxu0 0.0
    %744 = vmatmul.mubr.f32.gmra.mrb[0].mxu0 %v574
    %v745 = vpop.f32.mrb[0].mxu0
    %v746 = vadd.f32 0.0, %v745
    %v747 = vpop.f32.mrb[0].mxu0
    %748 = vmatprep.mubr.f32.mxu0 0.0
    %749 = vmatmul.mubr.f32.gmra.mrb[0].mxu0 %v577
    %v750 = vpop.f32.mrb[0].mxu0
    %v751 = vadd.f32 0.0, %v750
    %v752 = vpop.f32.mrb[0].mxu0
    %753 = vdwg.mxu0
    %v758 = vrot.slane %v736, 1
    %v759 = vrot.slane %v741, 1
    %v760 = vsel %vm237, %v758, %v759
    %v761 = vrot.slane %v746, 1
    %v762 = vrot.slane %v751, 1
    %v763 = vsel %vm237, %v761, %v762
    %v768 = vadd.f32 %v646, %v760
    %v769 = vadd.f32 %v651, %v759
    %v770 = vadd.f32 %v656, %v763
    %v771 = vadd.f32 %v661, %v762
    %s772 = scalar_lea.vmem [#allocation4], 192
    %v773 = vld [vmem:[%s772] sm:$0xff]
    %v774 = vld [vmem:[%s772 + $0x8] sm:$0xff]
    %v775 = vld [vmem:[%s772 + $0x10] sm:$0xff]
    %v776 = vld [vmem:[%s772 + $0x18] sm:$0xff]
    %777 = vmatprep.subr.mxu0 0.0
    %778 = vmatpush1.msra.mxu0 %v773
    %779 = vmatprep.subr.mxu0 0.0
    %780 = vmatpush1.msra.mxu0 %v774
    %781 = vmatprep.subr.mxu0 0.0
    %782 = vmatpush1.msra.mxu0 %v775
    %783 = vmatprep.subr.mxu0 0.0
    %784 = vmatpush1.msra.mxu0 %v776
    %785 = vmatprep.subr.mxu0 0.0
    %786 = vmatpush1.msra.mxu0 0.0
    %787 = vmatprep.subr.mxu0 0.0
    %788 = vmatpush1.msra.mxu0 0.0
    %789 = vmatprep.subr.mxu0 0.0
    %790 = vmatpush1.msra.mxu0 0.0
    %791 = vmatprep.subr.mxu0 0.0
    %792 = vmatpush1.msra.mxu0 0.0
    %793 = vmatprep.subr.mxu0 0.0
    %794 = vmatpush1.msra.mxu0 0.0
    %795 = vmatprep.subr.mxu0 0.0
    %796 = vmatpush1.msra.mxu0 0.0
    %797 = vmatprep.subr.mxu0 0.0
    %798 = vmatpush1.msra.mxu0 0.0
    %799 = vmatprep.subr.mxu0 0.0
    %800 = vmatpush1.msra.mxu0 0.0
    %801 = vmatprep.subr.mxu0 0.0
    %802 = vmatpush1.msra.mxu0 0.0
    %803 = vmatprep.subr.mxu0 0.0
    %804 = vmatpush1.msra.mxu0 0.0
    %805 = vmatprep.subr.mxu0 0.0
    %806 = vmatpush1.msra.mxu0 0.0
    %807 = vmatprep.subr.mxu0 0.0
    %808 = vmatpush1.msra.mxu0 0.0
    %809 = vmatprep.subr.mxu0 0.0
    %810 = vmatpush1.msra.mxu0 0.0
    %811 = vmatprep.subr.mxu0 0.0
    %812 = vmatpush1.msra.mxu0 0.0
    %813 = vmatprep.subr.mxu0 0.0
    %814 = vmatpush1.msra.mxu0 0.0
    %815 = vmatprep.subr.mxu0 0.0
    %816 = vmatpush1.msra.mxu0 0.0
    %817 = vmatprep.subr.mxu0 0.0
    %818 = vmatpush1.msra.mxu0 0.0
    %819 = vmatprep.subr.mxu0 0.0
    %820 = vmatpush1.msra.mxu0 0.0
    %821 = vmatprep.subr.mxu0 0.0
    %822 = vmatpush1.msra.mxu0 0.0
    %823 = vmatprep.subr.mxu0 0.0
    %824 = vmatpush1.msra.mxu0 0.0
    %825 = vmatprep.subr.mxu0 0.0
    %826 = vmatpush1.msra.mxu0 0.0
    %827 = vmatprep.subr.mxu0 0.0
    %828 = vmatpush1.msra.mxu0 0.0
    %829 = vmatprep.subr.mxu0 0.0
    %830 = vmatpush1.msra.mxu0 0.0
    %831 = vmatprep.subr.mxu0 0.0
    %832 = vmatpush1.msra.mxu0 0.0
    %833 = vmatprep.subr.mxu0 0.0
    %834 = vmatpush1.msra.mxu0 0.0
    %835 = vmatprep.subr.mxu0 0.0
    %836 = vmatpush1.msra.mxu0 0.0
    %837 = vmatprep.subr.mxu0 0.0
    %838 = vmatpush1.msra.mxu0 0.0
    %839 = vmatprep.subr.mxu0 0.0
    %840 = vmatpush1.msra.mxu0 0.0
    %841 = vmatprep.mubr.f32.mxu0 0.0
    %842 = vmatmul.mubr.f32.gmra.mrb[0].mxu0 %v568
    %v843 = vpop.f32.mrb[0].mxu0
    %v844 = vadd.f32 0.0, %v843
    %v845 = vpop.f32.mrb[0].mxu0
    %846 = vmatprep.mubr.f32.mxu0 0.0
    %847 = vmatmul.mubr.f32.gmra.mrb[0].mxu0 %v571
    %v848 = vpop.f32.mrb[0].mxu0
    %v849 = vadd.f32 0.0, %v848
    %v850 = vpop.f32.mrb[0].mxu0
    %851 = vmatprep.mubr.f32.mxu0 0.0
    %852 = vmatmul.mubr.f32.gmra.mrb[0].mxu0 %v574
    %v853 = vpop.f32.mrb[0].mxu0
    %v854 = vadd.f32 0.0, %v853
    %v855 = vpop.f32.mrb[0].mxu0
    %856 = vmatprep.mubr.f32.mxu0 0.0
    %857 = vmatmul.mubr.f32.gmra.mrb[0].mxu0 %v577
    %v858 = vpop.f32.mrb[0].mxu0
    %v859 = vadd.f32 0.0, %v858
    %v860 = vpop.f32.mrb[0].mxu0
    %861 = vdwg.mxu0
    %v866 = vrot.slane %v844, 2
    %v867 = vrot.slane %v849, 2
    %v868 = vsel %vm346, %v866, %v867
    %v869 = vrot.slane %v854, 2
    %v870 = vrot.slane %v859, 2
    %v871 = vsel %vm346, %v869, %v870
    %v876 = vadd.f32 %v768, %v868
    %v877 = vadd.f32 %v769, %v867
    %v878 = vadd.f32 %v770, %v871
    %v879 = vadd.f32 %v771, %v870
    %v880 = vlaneseq
    %v881 = vshrl.u32 %v880, 7
    %v882 = vsub.s32 0, %v881
    %v883 = vrot.slane %v561, %v882
    %v884 = vadd.f32 %v876, %v883
    %v885 = vadd.f32 %v877, %v883
    %v886 = vadd.f32 %v878, %v883
    %v887 = vadd.f32 %v879, %v883
    %v888 = vmax.f32 %v884, 0.0
    %v889 = vmax.f32 %v885, 0.0
    %v890 = vmax.f32 %v886, 0.0
    %v891 = vmax.f32 %v887, 0.0
    %892 = vst.msk [vmem:[#allocation2] sm:$0x1] %vm482, 0.0
    %893 = vst.msk [vmem:[#allocation2 + $0x10] sm:$0x1] %vm482, 0.0
    %894 = vst.msk [vmem:[#allocation2 + $0x1] sm:$0xff] %vm45, %v888
    %vm895 = vcmask 259072
    %896 = vst.msk [vmem:[#allocation2 + $0x9] sm:$0x3f] %vm895, %v889
    %897 = vst.msk [vmem:[#allocation2 + $0x11] sm:$0xff] %vm45, %v890
    %898 = vst.msk [vmem:[#allocation2 + $0x19] sm:$0x3f] %vm895, %v891
    %899 = vst.msk [vmem:[#allocation2 + $0xf] sm:$0x1] %vm482, 0.0
    %900 = vst.msk [vmem:[#allocation2 + $0x1f] sm:$0x1] %vm482, 0.0
    %v901 = vld [vmem:[#allocation2] sm:$0xff]
    %v902 = vld [vmem:[#allocation2 + $0x8] sm:$0xff]
    %v903 = vld [vmem:[#allocation2 + $0x10] sm:$0xff]
    %v904 = vld [vmem:[#allocation2 + $0x18] sm:$0xff]
    %v905 = vsel %vm45, %v901, 0.0
    %v906 = vsel %vm45, %v902, 0.0
    %v907 = vadd.f32 %v905, %v906
    %v908 = vsel %vm45, %v903, 0.0
    %v909 = vadd.f32 %v907, %v908
    %v910 = vsel %vm45, %v904, 0.0
    %v911 = vadd.f32 %v909, %v910
    %v912 = vrot.slane %v911, 4
    %v913 = vadd.f32 %v911, %v912
    %v914 = vrot.slane %v913, 2
    %v915 = vadd.f32 %v913, %v914
    %v916 = vrot.slane %v915, 1
    %v917 = vadd.f32 %v915, %v916
    %v918 = vmul.f32 %v917, %v510
    %v919 = vsub.f32 %v901, %v918
    %v920 = vsub.f32 %v902, %v918
    %v921 = vsub.f32 %v903, %v918
    %v922 = vsub.f32 %v904, %v918
    %v923 = vmul.f32 %v919, %v919
    %v924 = vmul.f32 %v920, %v920
    %v925 = vmul.f32 %v921, %v921
    %v926 = vmul.f32 %v922, %v922
    %v927 = vsel %vm45, %v923, 0.0
    %v928 = vsel %vm45, %v924, 0.0
    %v929 = vadd.f32 %v927, %v928
    %v930 = vsel %vm45, %v925, 0.0
    %v931 = vadd.f32 %v929, %v930
    %v932 = vsel %vm45, %v926, 0.0
    %v933 = vadd.f32 %v931, %v932
    %v934 = vrot.slane %v933, 4
    %v935 = vadd.f32 %v933, %v934
    %v936 = vrot.slane %v935, 2
    %v937 = vadd.f32 %v935, %v936
    %v938 = vrot.slane %v937, 1
    %v939 = vadd.f32 %v937, %v938
    %v940 = vmul.f32 %v939, %v510
    %v941 = vadd.f32 %v940, 1e-05
    %v942 = vrsqrt.pop %v941
    %v943 = vmul.f32 %v919, %v942
    %v944 = vmul.f32 %v920, %v942
    %v945 = vmul.f32 %v921, %v942
    %v946 = vmul.f32 %v922, %v942
    %v947 = vlaneseq
    %v948 = vshrl.u32 %v947, 7
    %v949 = vsub.s32 1, %v948
    %v950 = vrot.slane %v561, %v949
    %v951 = vmul.f32 %v943, %v950
    %v952 = vmul.f32 %v944, %v950
    %v953 = vmul.f32 %v945, %v950
    %v954 = vmul.f32 %v946, %v950
    %v955 = vlaneseq
    %v956 = vshrl.u32 %v955, 7
    %v957 = vsub.s32 2, %v956
    %v958 = vrot.slane %v561, %v957
    %v959 = vadd.f32 %v951, %v958
    %v960 = vadd.f32 %v952, %v958
    %v961 = vadd.f32 %v953, %v958
    %v962 = vadd.f32 %v954, %v958
    %v963 = vadd.f32 %v556, %v959
    %v964 = vadd.f32 %v557, %v960
    %v965 = vadd.f32 %v558, %v961
    %v966 = vadd.f32 %v559, %v962
    %s967 = scalar_lea.vmem %s2, 8
    %v968 = vld [vmem:[%s967] sm:$0x7]
    %s969 = scalar_lea.vmem [#allocation4], 224
    %v970 = vld [vmem:[%s969] sm:$0xff]
    %v971 = vld [vmem:[%s969 + $0x8] sm:$0xff]
    %v972 = vld [vmem:[%s969 + $0x10] sm:$0xff]
    %v973 = vld [vmem:[%s969 + $0x18] sm:$0xff]
    %v975 = vsel %vm45, %v963, 0
    %v978 = vsel %vm45, %v964, 0
    %v981 = vsel %vm45, %v965, 0
    %v984 = vsel %vm45, %v966, 0
    %986 = vmatprep.subr.mxu0 0.0
    %987 = vmatpush1.msra.mxu0 %v970
    %988 = vmatprep.subr.mxu0 0.0
    %989 = vmatpush1.msra.mxu0 %v971
    %990 = vmatprep.subr.mxu0 0.0
    %991 = vmatpush1.msra.mxu0 %v972
    %992 = vmatprep.subr.mxu0 0.0
    %993 = vmatpush1.msra.mxu0 %v973
    %994 = vmatprep.subr.mxu0 0.0
    %995 = vmatpush1.msra.mxu0 0.0
    %996 = vmatprep.subr.mxu0 0.0
    %997 = vmatpush1.msra.mxu0 0.0
    %998 = vmatprep.subr.mxu0 0.0
    %999 = vmatpush1.msra.mxu0 0.0
    %1000 = vmatprep.subr.mxu0 0.0
    %1001 = vmatpush1.msra.mxu0 0.0
    %1002 = vmatprep.subr.mxu0 0.0
    %1003 = vmatpush1.msra.mxu0 0.0
    %1004 = vmatprep.subr.mxu0 0.0
    %1005 = vmatpush1.msra.mxu0 0.0
    %1006 = vmatprep.subr.mxu0 0.0
    %1007 = vmatpush1.msra.mxu0 0.0
    %1008 = vmatprep.subr.mxu0 0.0
    %1009 = vmatpush1.msra.mxu0 0.0
    %1010 = vmatprep.subr.mxu0 0.0
    %1011 = vmatpush1.msra.mxu0 0.0
    %1012 = vmatprep.subr.mxu0 0.0
    %1013 = vmatpush1.msra.mxu0 0.0
    %1014 = vmatprep.subr.mxu0 0.0
    %1015 = vmatpush1.msra.mxu0 0.0
    %1016 = vmatprep.subr.mxu0 0.0
    %1017 = vmatpush1.msra.mxu0 0.0
    %1018 = vmatprep.subr.mxu0 0.0
    %1019 = vmatpush1.msra.mxu0 0.0
    %1020 = vmatprep.subr.mxu0 0.0
    %1021 = vmatpush1.msra.mxu0 0.0
    %1022 = vmatprep.subr.mxu0 0.0
    %1023 = vmatpush1.msra.mxu0 0.0
    %1024 = vmatprep.subr.mxu0 0.0
    %1025 = vmatpush1.msra.mxu0 0.0
    %1026 = vmatprep.subr.mxu0 0.0
    %1027 = vmatpush1.msra.mxu0 0.0
    %1028 = vmatprep.subr.mxu0 0.0
    %1029 = vmatpush1.msra.mxu0 0.0
    %1030 = vmatprep.subr.mxu0 0.0
    %1031 = vmatpush1.msra.mxu0 0.0
    %1032 = vmatprep.subr.mxu0 0.0
    %1033 = vmatpush1.msra.mxu0 0.0
    %1034 = vmatprep.subr.mxu0 0.0
    %1035 = vmatpush1.msra.mxu0 0.0
    %1036 = vmatprep.subr.mxu0 0.0
    %1037 = vmatpush1.msra.mxu0 0.0
    %1038 = vmatprep.subr.mxu0 0.0
    %1039 = vmatpush1.msra.mxu0 0.0
    %1040 = vmatprep.subr.mxu0 0.0
    %1041 = vmatpush1.msra.mxu0 0.0
    %1042 = vmatprep.subr.mxu0 0.0
    %1043 = vmatpush1.msra.mxu0 0.0
    %1044 = vmatprep.subr.mxu0 0.0
    %1045 = vmatpush1.msra.mxu0 0.0
    %1046 = vmatprep.subr.mxu0 0.0
    %1047 = vmatpush1.msra.mxu0 0.0
    %1048 = vmatprep.subr.mxu0 0.0
    %1049 = vmatpush1.msra.mxu0 0.0
    %1050 = vmatprep.mubr.f32.mxu0 0.0
    %1051 = vmatmul.mubr.f32.gmra.mrb[0].mxu0 %v975
    %v1052 = vpop.f32.mrb[0].mxu0
    %v1053 = vadd.f32 0.0, %v1052
    %v1054 = vpop.f32.mrb[0].mxu0
    %1055 = vmatprep.mubr.f32.mxu0 0.0
    %1056 = vmatmul.mubr.f32.gmra.mrb[0].mxu0 %v978
    %v1057 = vpop.f32.mrb[0].mxu0
    %v1058 = vadd.f32 0.0, %v1057
    %v1059 = vpop.f32.mrb[0].mxu0
    %1060 = vmatprep.mubr.f32.mxu0 0.0
    %1061 = vmatmul.mubr.f32.gmra.mrb[0].mxu0 %v981
    %v1062 = vpop.f32.mrb[0].mxu0
    %v1063 = vadd.f32 0.0, %v1062
    %v1064 = vpop.f32.mrb[0].mxu0
    %1065 = vmatprep.mubr.f32.mxu0 0.0
    %1066 = vmatmul.mubr.f32.gmra.mrb[0].mxu0 %v984
    %v1067 = vpop.f32.mrb[0].mxu0
    %v1068 = vadd.f32 0.0, %v1067
    %v1069 = vpop.f32.mrb[0].mxu0
    %1070 = vdwg.mxu0
    %v1071 = vlaneseq
    %v1072 = vshrl.u32 %v1071, 7
    %v1073 = vsub.s32 0, %v1072
    %v1074 = vrot.slane %v968, %v1073
    %v1075 = vadd.f32 %v1053, %v1074
    %v1076 = vadd.f32 %v1058, %v1074
    %v1077 = vadd.f32 %v1063, %v1074
    %v1078 = vadd.f32 %v1068, %v1074
    %v1079 = vmax.f32 %v1075, 0.0
    %v1080 = vmax.f32 %v1076, 0.0
    %v1081 = vmax.f32 %v1077, 0.0
    %v1082 = vmax.f32 %v1078, 0.0
    %v1083 = vsel %vm45, %v1079, 0.0
    %v1084 = vsel %vm45, %v1080, 0.0
    %v1085 = vadd.f32 %v1083, %v1084
    %v1086 = vsel %vm45, %v1081, 0.0
    %v1087 = vadd.f32 %v1085, %v1086
    %v1088 = vsel %vm45, %v1082, 0.0
    %v1089 = vadd.f32 %v1087, %v1088
    %v1090 = vrot.slane %v1089, 4
    %v1091 = vadd.f32 %v1089, %v1090
    %v1092 = vrot.slane %v1091, 2
    %v1093 = vadd.f32 %v1091, %v1092
    %v1094 = vrot.slane %v1093, 1
    %v1095 = vadd.f32 %v1093, %v1094
    %v1096 = vmul.f32 %v1095, %v510
    %v1097 = vsub.f32 %v1079, %v1096
    %v1098 = vsub.f32 %v1080, %v1096
    %v1099 = vsub.f32 %v1081, %v1096
    %v1100 = vsub.f32 %v1082, %v1096
    %v1101 = vmul.f32 %v1097, %v1097
    %v1102 = vmul.f32 %v1098, %v1098
    %v1103 = vmul.f32 %v1099, %v1099
    %v1104 = vmul.f32 %v1100, %v1100
    %v1105 = vsel %vm45, %v1101, 0.0
    %v1106 = vsel %vm45, %v1102, 0.0
    %v1107 = vadd.f32 %v1105, %v1106
    %v1108 = vsel %vm45, %v1103, 0.0
    %v1109 = vadd.f32 %v1107, %v1108
    %v1110 = vsel %vm45, %v1104, 0.0
    %v1111 = vadd.f32 %v1109, %v1110
    %v1112 = vrot.slane %v1111, 4
    %v1113 = vadd.f32 %v1111, %v1112
    %v1114 = vrot.slane %v1113, 2
    %v1115 = vadd.f32 %v1113, %v1114
    %v1116 = vrot.slane %v1115, 1
    %v1117 = vadd.f32 %v1115, %v1116
    %v1118 = vmul.f32 %v1117, %v510
    %v1119 = vadd.f32 %v1118, 1e-05
    %v1120 = vrsqrt.pop %v1119
    %v1121 = vmul.f32 %v1097, %v1120
    %v1122 = vmul.f32 %v1098, %v1120
    %v1123 = vmul.f32 %v1099, %v1120
    %v1124 = vmul.f32 %v1100, %v1120
    %v1125 = vlaneseq
    %v1126 = vshrl.u32 %v1125, 7
    %v1127 = vsub.s32 1, %v1126
    %v1128 = vrot.slane %v968, %v1127
    %v1129 = vmul.f32 %v1121, %v1128
    %v1130 = vmul.f32 %v1122, %v1128
    %v1131 = vmul.f32 %v1123, %v1128
    %v1132 = vmul.f32 %v1124, %v1128
    %v1133 = vlaneseq
    %v1134 = vshrl.u32 %v1133, 7
    %v1135 = vsub.s32 2, %v1134
    %v1136 = vrot.slane %v968, %v1135
    %v1137 = vadd.f32 %v1129, %v1136
    %v1138 = vadd.f32 %v1130, %v1136
    %v1139 = vadd.f32 %v1131, %v1136
    %v1140 = vadd.f32 %v1132, %v1136
    %v1141 = vadd.f32 %v963, %v1137
    %v1142 = vadd.f32 %v964, %v1138
    %v1143 = vadd.f32 %v965, %v1139
    %v1144 = vadd.f32 %v966, %v1140
    %v1145 = vld [vmem:[%s3] sm:$0xff]
    %v1146 = vld [vmem:[%s3 + $0x8] sm:$0xff]
    %v1147 = vld [vmem:[%s3 + $0x10] sm:$0xff]
    %v1148 = vld [vmem:[%s3 + $0x18] sm:$0xff]
    %v1149 = vld [vmem:[#allocation3] sm:$0x1]
    %v1151 = vlaneseq
    %v1152 = vshrl.u32 %v1151, 7
    %v1153 = vsub.s32 0, %v1152
    %v1154 = vrot.slane %v1149, %v1153
    %v1157 = vsel %vm45, %v1141, 0
    %v1160 = vsel %vm45, %v1142, 0
    %v1163 = vsel %vm45, %v1143, 0
    %v1166 = vsel %vm45, %v1144, 0
    %1168 = vmatprep.subr.mxu0 0.0
    %1169 = vmatpush1.msra.mxu0 %v1145
    %1170 = vmatprep.subr.mxu0 0.0
    %1171 = vmatpush1.msra.mxu0 %v1146
    %1172 = vmatprep.subr.mxu0 0.0
    %1173 = vmatpush1.msra.mxu0 %v1147
    %1174 = vmatprep.subr.mxu0 0.0
    %1175 = vmatpush1.msra.mxu0 %v1148
    %1176 = vmatprep.subr.mxu0 0.0
    %1177 = vmatpush1.msra.mxu0 0.0
    %1178 = vmatprep.subr.mxu0 0.0
    %1179 = vmatpush1.msra.mxu0 0.0
    %1180 = vmatprep.subr.mxu0 0.0
    %1181 = vmatpush1.msra.mxu0 0.0
    %1182 = vmatprep.subr.mxu0 0.0
    %1183 = vmatpush1.msra.mxu0 0.0
    %1184 = vmatprep.subr.mxu0 0.0
    %1185 = vmatpush1.msra.mxu0 0.0
    %1186 = vmatprep.subr.mxu0 0.0
    %1187 = vmatpush1.msra.mxu0 0.0
    %1188 = vmatprep.subr.mxu0 0.0
    %1189 = vmatpush1.msra.mxu0 0.0
    %1190 = vmatprep.subr.mxu0 0.0
    %1191 = vmatpush1.msra.mxu0 0.0
    %1192 = vmatprep.subr.mxu0 0.0
    %1193 = vmatpush1.msra.mxu0 0.0
    %1194 = vmatprep.subr.mxu0 0.0
    %1195 = vmatpush1.msra.mxu0 0.0
    %1196 = vmatprep.subr.mxu0 0.0
    %1197 = vmatpush1.msra.mxu0 0.0
    %1198 = vmatprep.subr.mxu0 0.0
    %1199 = vmatpush1.msra.mxu0 0.0
    %1200 = vmatprep.subr.mxu0 0.0
    %1201 = vmatpush1.msra.mxu0 0.0
    %1202 = vmatprep.subr.mxu0 0.0
    %1203 = vmatpush1.msra.mxu0 0.0
    %1204 = vmatprep.subr.mxu0 0.0
    %1205 = vmatpush1.msra.mxu0 0.0
    %1206 = vmatprep.subr.mxu0 0.0
    %1207 = vmatpush1.msra.mxu0 0.0
    %1208 = vmatprep.subr.mxu0 0.0
    %1209 = vmatpush1.msra.mxu0 0.0
    %1210 = vmatprep.subr.mxu0 0.0
    %1211 = vmatpush1.msra.mxu0 0.0
    %1212 = vmatprep.subr.mxu0 0.0
    %1213 = vmatpush1.msra.mxu0 0.0
    %1214 = vmatprep.subr.mxu0 0.0
    %1215 = vmatpush1.msra.mxu0 0.0
    %1216 = vmatprep.subr.mxu0 0.0
    %1217 = vmatpush1.msra.mxu0 0.0
    %1218 = vmatprep.subr.mxu0 0.0
    %1219 = vmatpush1.msra.mxu0 0.0
    %1220 = vmatprep.subr.mxu0 0.0
    %1221 = vmatpush1.msra.mxu0 0.0
    %1222 = vmatprep.subr.mxu0 0.0
    %1223 = vmatpush1.msra.mxu0 0.0
    %1224 = vmatprep.subr.mxu0 0.0
    %1225 = vmatpush1.msra.mxu0 0.0
    %1226 = vmatprep.subr.mxu0 0.0
    %1227 = vmatpush1.msra.mxu0 0.0
    %1228 = vmatprep.subr.mxu0 0.0
    %1229 = vmatpush1.msra.mxu0 0.0
    %1230 = vmatprep.subr.mxu0 0.0
    %1231 = vmatpush1.msra.mxu0 0.0
    %1232 = vmatprep.mubr.f32.mxu0 0.0
    %1233 = vmatmul.mubr.f32.gmra.mrb[0].mxu0 %v1157
    %v1234 = vpop.f32.mrb[0].mxu0
    %v1235 = vadd.f32 %v1154, %v1234
    %v1236 = vpop.f32.mrb[0].mxu0
    %1237 = vmatprep.mubr.f32.mxu0 0.0
    %1238 = vmatmul.mubr.f32.gmra.mrb[0].mxu0 %v1160
    %v1239 = vpop.f32.mrb[0].mxu0
    %v1240 = vadd.f32 %v1154, %v1239
    %v1241 = vpop.f32.mrb[0].mxu0
    %1242 = vmatprep.mubr.f32.mxu0 0.0
    %1243 = vmatmul.mubr.f32.gmra.mrb[0].mxu0 %v1163
    %v1244 = vpop.f32.mrb[0].mxu0
    %v1245 = vadd.f32 %v1154, %v1244
    %v1246 = vpop.f32.mrb[0].mxu0
    %1247 = vmatprep.mubr.f32.mxu0 0.0
    %1248 = vmatmul.mubr.f32.gmra.mrb[0].mxu0 %v1166
    %v1249 = vpop.f32.mrb[0].mxu0
    %v1250 = vadd.f32 %v1154, %v1249
    %v1251 = vpop.f32.mrb[0].mxu0
    %1252 = vdwg.mxu0
    %vm1253 = vcmask 7168
    %1254 = vst.msk [vmem:[%s5] sm:$0xff] %vm1253, %v1235
    %1255 = vst.msk [vmem:[%s5 + $0x8] sm:$0xff] %vm1253, %v1240
    %1256 = vst.msk [vmem:[%s5 + $0x10] sm:$0xff] %vm1253, %v1245
    %1257 = vst.msk [vmem:[%s5 + $0x18] sm:$0xff] %vm1253, %v1250
    // Predicated region
    $region26: #{tpu_custom_call.1} parent=1 // pred_check
      _
    $region27: #{tpu_custom_call.1} parent=1 // pred_check_branch
      %1259 = sbr.rel (0) target = $region29
    $region28: #{tpu_custom_call.1} parent=1 // pred_region
      _
    $region29: #{tpu_custom_call.1} parent=1 // pred_fallthru
      _
    // Predicated region
    $region30: #{tpu_custom_call.1} parent=1 // pred_check
      _
    $region31: #{tpu_custom_call.1} parent=1 // pred_check_branch
      %1261 = sbr.rel (0) target = $region33
    $region32: #{tpu_custom_call.1} parent=1 // pred_region
      _
    $region33: #{tpu_custom_call.1} parent=1 // pred_fallthru
      _
    %1262 = vsyncpa [#allocation5], 1

</llo_original>
